<compile_context>
chip_gen: v6e
topology: v6e:2x2x1
jax: 0.10.0
libtpu: 0.0.40
codegen_flags: <defaults>
</compile_context>

<pallas_src>
import numpy as np
import jax
import jax.numpy as jnp
from jax.experimental import pallas as pl
from jax.experimental.pallas import tpu as pltpu


BN_EPS = 1e-5
LANE = 128


def _round_up(x, m):
    return ((x + m - 1) // m) * m


def _encoder1_kernel(a_ref, p_ref, h0_ref, w1t_ref, w2t_ref,
                     g1_ref, b1_ref, g2_ref, b2_ref,
                     h_out_ref, pool_out_ref):
    """One grid step == one full GIN layer.

    h_out_ref (constant output index_map -> resident across the layer axis)
    doubles as the cross-layer carry, so there is no separate VMEM scratch.
    """
    layer = pl.program_id(0)
    inv_n = 1.0 / float(h0_ref.shape[0])

    @pl.when(layer == 0)
    def _():
        h_out_ref[...] = h0_ref[...]

    h = h_out_ref[...]                                   # f32 [N, FP]

    # GIN aggregation (eps = 0): h + A @ h. A is exact 0/1 bf16; h cast to bf16
    # for a single-pass MXU matmul, accumulated in f32.
    agg = h + jnp.dot(a_ref[...], h.astype(jnp.bfloat16),
                      preferred_element_type=jnp.float32)

    # --- MLP: Linear1 (no bias) -> BatchNorm1d -> ReLU -> Linear2 (no bias) ---
    z = jnp.dot(agg.astype(jnp.bfloat16), w1t_ref[...],
                preferred_element_type=jnp.float32)
    mu1 = jnp.sum(z, axis=0, keepdims=True) * inv_n
    d1 = z - mu1
    var1 = jnp.sum(d1 * d1, axis=0, keepdims=True) * inv_n      # biased variance
    z = d1 * jax.lax.rsqrt(var1 + BN_EPS) * g1_ref[...] + b1_ref[...]
    z = jnp.maximum(z, 0.0)
    z = jnp.dot(z.astype(jnp.bfloat16), w2t_ref[...],
                preferred_element_type=jnp.float32)

    # --- outer BatchNorm + ReLU ---
    mu2 = jnp.sum(z, axis=0, keepdims=True) * inv_n
    d2 = z - mu2
    var2 = jnp.sum(d2 * d2, axis=0, keepdims=True) * inv_n
    z = d2 * jax.lax.rsqrt(var2 + BN_EPS) * g2_ref[...] + b2_ref[...]
    z = jnp.maximum(z, 0.0)

    h_out_ref[...] = z                                   # carry to next layer (VMEM)
    # SumPooling: one-hot membership matrix P (bf16, resident) @ h.
    pool_out_ref[...] = jnp.dot(p_ref[...], z.astype(jnp.bfloat16),
                                preferred_element_type=jnp.float32)


class Encoder1Pallas:
    """Deterministically-initialized JAX/Pallas equivalent of Encoder1."""

    def __init__(self, in_hidden, out_hidden, hidden, num_layers, key):
        self.num_layers = num_layers
        self.hidden = hidden
        # TODO(synk): make the lane-padding constant generation-aware (256 on
        # v6e/v7x) once out_hidden/hidden exceed 128; 128 is the floor here.
        self.fp = _round_up(max(in_hidden, out_hidden, hidden), LANE)
        fp = self.fp

        w1t_list, w2t_list = [], []
        g1_list, b1_list, g2_list, b2_list = [], [], [], []
        for layer in range(num_layers):
            in_dim = in_hidden if layer == 0 else hidden
            key, k1, k2 = jax.random.split(key, 3)
            # nn.Linear default-ish init: uniform(-1/sqrt(fan_in), 1/sqrt(fan_in))
            lim1 = 1.0 / float(np.sqrt(in_dim))
            lim2 = 1.0 / float(np.sqrt(out_hidden))
            w1 = jax.random.uniform(k1, (out_hidden, in_dim), jnp.float32, -lim1, lim1)
            w2 = jax.random.uniform(k2, (hidden, out_hidden), jnp.float32, -lim2, lim2)
            # Pre-transpose once, zero-pad feature dims to the lane width, store
            # as bf16 (MXU-native, half the per-layer weight DMA). Padded
            # rows/cols are exactly zero so padded feature lanes stay zero.
            w1t = jnp.zeros((fp, fp), jnp.float32).at[:in_dim, :out_hidden].set(w1.T)
            w2t = jnp.zeros((fp, fp), jnp.float32).at[:out_hidden, :hidden].set(w2.T)
            w1t_list.append(w1t.astype(jnp.bfloat16))
            w2t_list.append(w2t.astype(jnp.bfloat16))
            # BatchNorm defaults: gamma=1, beta=0 (padded lanes stay 0 regardless).
            g1_list.append(jnp.ones((1, fp), jnp.float32))
            b1_list.append(jnp.zeros((1, fp), jnp.float32))
            g2_list.append(jnp.ones((1, fp), jnp.float32))
            b2_list.append(jnp.zeros((1, fp), jnp.float32))

        self.w1t = jnp.stack(w1t_list)    # [L, FP, FP] bf16
        self.w2t = jnp.stack(w2t_list)    # [L, FP, FP] bf16
        self.g1 = jnp.stack(g1_list)      # [L, 1, FP] f32
        self.b1 = jnp.stack(b1_list)
        self.g2 = jnp.stack(g2_list)
        self.b2 = jnp.stack(b2_list)

    def _forward(self, a_bf16, p_bf16, h_pad, vmem_limit, single_buffer_resident):
        n, fp = h_pad.shape
        g = p_bf16.shape[0]
        num_layers = self.num_layers

        # Resident (constant index_map) inputs never re-DMA; a second pipeline
        # buffer for them is pure VMEM waste (A alone is N^2 bf16 bytes).
        resident = {"pipeline_mode": pl.Buffered(1)} if single_buffer_resident else {}

        in_specs = [
            pl.BlockSpec((n, n), lambda l: (0, 0), **resident),          # A (bf16)
            pl.BlockSpec((g, n), lambda l: (0, 0), **resident),          # P (bf16)
            pl.BlockSpec((n, fp), lambda l: (0, 0), **resident),         # h0 (f32)
            pl.BlockSpec((None, fp, fp), lambda l: (l, 0, 0)),           # W1^T (bf16)
            pl.BlockSpec((None, fp, fp), lambda l: (l, 0, 0)),           # W2^T (bf16)
            pl.BlockSpec((None, 1, fp), lambda l: (l, 0, 0)),            # gamma1
            pl.BlockSpec((None, 1, fp), lambda l: (l, 0, 0)),            # beta1
            pl.BlockSpec((None, 1, fp), lambda l: (l, 0, 0)),            # gamma2
            pl.BlockSpec((None, 1, fp), lambda l: (l, 0, 0)),            # beta2
        ]
        return pl.pallas_call(
            _encoder1_kernel,
            out_shape=(
                jax.ShapeDtypeStruct((n, fp), jnp.float32),
                jax.ShapeDtypeStruct((g, num_layers * fp), jnp.float32),
            ),
            grid=(num_layers,),
            in_specs=in_specs,
            out_specs=(
                pl.BlockSpec((n, fp), lambda l: (0, 0)),   # final h: resident carry
                pl.BlockSpec((g, fp), lambda l: (0, l)),   # lane-dense pooled slab
            ),
            compiler_params=pltpu.CompilerParams(
                dimension_semantics=("arbitrary",),        # layer loop is sequential
                vmem_limit_bytes=vmem_limit,
            ),
        )(a_bf16, p_bf16, h_pad,
          self.w1t, self.w2t, self.g1, self.b1, self.g2, self.b2)

    def __call__(self, a, p, h):
        n = h.shape[0]
        g = p.shape[0]
        fp = self.fp

        a_bf16 = a.astype(jnp.bfloat16)       # 0/1 adjacency: exact in bf16
        p_bf16 = p.astype(jnp.bfloat16)       # 0/1 membership: exact in bf16
        h_pad = jnp.zeros((n, fp), jnp.float32).at[:, :h.shape[1]].set(h)

        # VMEM budget: single-buffered residents + double-buffered streamed
        # blocks, 2x headroom, capped at the chip's actual VMEM capacity.
        est = (a_bf16.size * 2 + p_bf16.size * 2 + h_pad.size * 4
               + 2 * (2 * fp * fp * 2)         # bf16 W1^T/W2^T, double-buffered
               + 4 * (2 * fp * 4)              # gamma/beta blocks
               + 2 * (n * fp * 4)              # resident h output (carry) + slack
               + 2 * (g * fp * 4))             # pooled block, double-buffered
        try:
            vmem_cap = pltpu.get_tpu_info().vmem_capacity_bytes
        except Exception:
            vmem_cap = 64 << 20                # conservative default (v7x per-TC)
        vmem_limit = int(min(max(2 * est, 16 << 20), vmem_cap - (8 << 20)))

        try:
            h_out, pool_out = self._forward(a_bf16, p_bf16, h_pad, vmem_limit, True)
        except Exception:
            # pipeline_mode=pl.Buffered(1) not supported by this jax build:
            # fall back to default (double-buffered) pipelining.
            h_out, pool_out = self._forward(a_bf16, p_bf16, h_pad, vmem_limit, False)

        # Strip feature padding (glue only; tiny).
        h_final = h_out[:, :self.hidden]
        pooled = pool_out.reshape(g, self.num_layers, fp)[:, :, :self.hidden]
        pooled = pooled.reshape(g, self.num_layers * self.hidden)
        return h_final, pooled


def build_graph(num_graphs, nodes_per_graph):
    """Deterministic batched graph: a ring per component (dense adj + pooling)."""
    n = num_graphs * nodes_per_graph
    a = np.zeros((n, n), np.float32)
    for gi in range(num_graphs):
        base = gi * nodes_per_graph
        for i in range(nodes_per_graph):
            src = base + i
            dst = base + (i + 1) % nodes_per_graph
            a[src, dst] = 1.0
            a[dst, src] = 1.0
    p = np.zeros((num_graphs, n), np.float32)
    for gi in range(num_graphs):
        p[gi, gi * nodes_per_graph:(gi + 1) * nodes_per_graph] = 1.0
    return jnp.asarray(a), jnp.asarray(p)


if __name__ == "__main__":
    # Small shapes: 2 graphs x 8 nodes, in_hidden=8, out_hidden=32, hidden=16, 2 layers.
    num_graphs, nodes_per_graph = 2, 8
    in_hidden, out_hidden, hidden, num_layers = 8, 32, 16, 2

    key = jax.random.PRNGKey(0)
    key, kx, kp = jax.random.split(key, 3)

    a, p = build_graph(num_graphs, nodes_per_graph)
    h0 = jax.random.normal(kx, (num_graphs * nodes_per_graph, in_hidden), jnp.float32)

    model = Encoder1Pallas(in_hidden, out_hidden, hidden, num_layers, kp)
    h_final, pooled_cat = model(a, p, h0)
    jax.block_until_ready((h_final, pooled_cat))

    assert h_final.shape == (num_graphs * nodes_per_graph, hidden)
    assert pooled_cat.shape == (num_graphs, num_layers * hidden)
    assert bool(jnp.all(jnp.isfinite(h_final))) and bool(jnp.all(jnp.isfinite(pooled_cat)))
    print("KERNEL_OK")
</pallas_src>

<mosaic_0001>
module attributes {stable_mosaic.version = 11 : i64} {
  func.func @_encoder1_kernel(%arg0: i32, %arg1: memref<16x16xbf16, #tpu.memory_space<vmem>>, %arg2: memref<2x16xbf16, #tpu.memory_space<vmem>>, %arg3: memref<16x128xf32, #tpu.memory_space<vmem>>, %arg4: memref<1x128x128xbf16, #tpu.memory_space<vmem>>, %arg5: memref<1x128x128xbf16, #tpu.memory_space<vmem>>, %arg6: memref<1x1x128xf32, #tpu.memory_space<vmem>>, %arg7: memref<1x1x128xf32, #tpu.memory_space<vmem>>, %arg8: memref<1x1x128xf32, #tpu.memory_space<vmem>>, %arg9: memref<1x1x128xf32, #tpu.memory_space<vmem>>, %arg10: memref<16x128xf32, #tpu.memory_space<vmem>>, %arg11: memref<2x128xf32, #tpu.memory_space<vmem>>) attributes {dimension_semantics = [#tpu.dimension_semantics<arbitrary>], iteration_bounds = array<i64: 2>, scalar_prefetch = 0 : i64, scratch_operands = 0 : i64, tpu.core_type = #tpu.core_type<tc>, window_params = [{pipeline_mode = #tpu.pipeline_mode<synchronous>, transform_indices = @transform_0, window_bounds = array<i64: 16, 16>}, {pipeline_mode = #tpu.pipeline_mode<synchronous>, transform_indices = @transform_1, window_bounds = array<i64: 2, 16>}, {pipeline_mode = #tpu.pipeline_mode<synchronous>, transform_indices = @transform_2, window_bounds = array<i64: 16, 128>}, {transform_indices = @transform_3, window_bounds = array<i64: 1, 128, 128>}, {transform_indices = @transform_4, window_bounds = array<i64: 1, 128, 128>}, {transform_indices = @transform_5, window_bounds = array<i64: 1, 1, 128>}, {transform_indices = @transform_6, window_bounds = array<i64: 1, 1, 128>}, {transform_indices = @transform_7, window_bounds = array<i64: 1, 1, 128>}, {transform_indices = @transform_8, window_bounds = array<i64: 1, 1, 128>}, {pipeline_mode = #tpu.pipeline_mode<synchronous>, transform_indices = @transform_9, window_bounds = array<i64: 16, 128>}, {transform_indices = @transform_10, window_bounds = array<i64: 2, 128>}]} {
    %c0_i32 = arith.constant 0 : i32
    %0 = arith.cmpi eq, %arg0, %c0_i32 : i32
    %1 = arith.extui %0 : i1 to i32
    %c0_i32_0 = arith.constant 0 : i32
    %2 = arith.cmpi ne, %1, %c0_i32_0 : i32
    scf.if %2 {
      %c0_43 = arith.constant 0 : index
      %c0_44 = arith.constant 0 : index
      %73 = vector.load %arg3[%c0_43, %c0_44] : memref<16x128xf32, #tpu.memory_space<vmem>>, vector<16x128xf32>
      %c0_45 = arith.constant 0 : index
      %c0_46 = arith.constant 0 : index
      %74 = vector.load %arg10[%c0_45, %c0_46] : memref<16x128xf32, #tpu.memory_space<vmem>>, vector<16x128xf32>
      tpu.vector_store %arg10[%c0_45, %c0_46], %73 {strides = array<i32>} : memref<16x128xf32, #tpu.memory_space<vmem>>, vector<16x128xf32>,
    } else {
    }
    %c0 = arith.constant 0 : index
    %c0_1 = arith.constant 0 : index
    %3 = vector.load %arg10[%c0, %c0_1] : memref<16x128xf32, #tpu.memory_space<vmem>>, vector<16x128xf32>
    %c0_2 = arith.constant 0 : index
    %c0_3 = arith.constant 0 : index
    %4 = vector.load %arg1[%c0_2, %c0_3] : memref<16x16xbf16, #tpu.memory_space<vmem>>, vector<16x16xbf16>
    %5 = arith.truncf %3 : vector<16x128xf32> to vector<16x128xbf16>
    %cst = arith.constant dense<0.000000e+00> : vector<16x128xf32>
    %6 = tpu.matmul %4, %5, %cst {dimension_numbers = #tpu.dot_dimension_numbers<[1], [0], [0], [1], [0, 0, 1, 1], [], []>} : vector<16x16xbf16>, vector<16x128xbf16>, vector<16x128xf32> -> vector<16x128xf32>
    %7 = arith.addf %3, %6 : vector<16x128xf32>
    %8 = arith.truncf %7 : vector<16x128xf32> to vector<16x128xbf16>
    %c0_4 = arith.constant 0 : index
    %c0_5 = arith.constant 0 : index
    %c0_6 = arith.constant 0 : index
    %9 = vector.load %arg4[%c0_4, %c0_5, %c0_6] : memref<1x128x128xbf16, #tpu.memory_space<vmem>>, vector<1x128x128xbf16>
    %10 = vector.shape_cast %9 : vector<1x128x128xbf16> to vector<128x128xbf16>
    %cst_7 = arith.constant dense<0.000000e+00> : vector<16x128xf32>
    %11 = tpu.matmul %8, %10, %cst_7 {dimension_numbers = #tpu.dot_dimension_numbers<[1], [0], [0], [1], [0, 0, 1, 1], [], []>} : vector<16x128xbf16>, vector<128x128xbf16>, vector<16x128xf32> -> vector<16x128xf32>
    %cst_8 = arith.constant dense<0.000000e+00> : vector<128xf32>
    %12 = vector.multi_reduction <add>, %11, %cst_8 [0] : vector<16x128xf32> to vector<128xf32>
    %13 = vector.shape_cast %12 : vector<128xf32> to vector<1x128xf32>
    %cst_9 = arith.constant 6.250000e-02 : f32
    %14 = vector.broadcast %cst_9 : f32 to vector<1x128xf32>
    %15 = arith.mulf %13, %14 : vector<1x128xf32>
    %16 = vector.broadcast %15 : vector<1x128xf32> to vector<16x128xf32>
    %17 = arith.subf %11, %16 : vector<16x128xf32>
    %18 = arith.mulf %17, %17 : vector<16x128xf32>
    %cst_10 = arith.constant dense<0.000000e+00> : vector<128xf32>
    %19 = vector.multi_reduction <add>, %18, %cst_10 [0] : vector<16x128xf32> to vector<128xf32>
    %20 = vector.shape_cast %19 : vector<128xf32> to vector<1x128xf32>
    %cst_11 = arith.constant 6.250000e-02 : f32
    %21 = vector.broadcast %cst_11 : f32 to vector<1x128xf32>
    %22 = arith.mulf %20, %21 : vector<1x128xf32>
    %cst_12 = arith.constant 9.99999974E-6 : f32
    %23 = vector.broadcast %cst_12 : f32 to vector<1x128xf32>
    %24 = arith.addf %22, %23 : vector<1x128xf32>
    %25 = math.rsqrt %24 : vector<1x128xf32>
    %26 = vector.broadcast %25 : vector<1x128xf32> to vector<16x128xf32>
    %27 = arith.mulf %17, %26 : vector<16x128xf32>
    %c0_13 = arith.constant 0 : index
    %c0_14 = arith.constant 0 : index
    %c0_15 = arith.constant 0 : index
    %28 = vector.load %arg6[%c0_13, %c0_14, %c0_15] : memref<1x1x128xf32, #tpu.memory_space<vmem>>, vector<1x1x128xf32>
    %29 = vector.shape_cast %28 : vector<1x1x128xf32> to vector<1x128xf32>
    %30 = vector.broadcast %29 : vector<1x128xf32> to vector<16x128xf32>
    %31 = arith.mulf %27, %30 : vector<16x128xf32>
    %c0_16 = arith.constant 0 : index
    %c0_17 = arith.constant 0 : index
    %c0_18 = arith.constant 0 : index
    %32 = vector.load %arg7[%c0_16, %c0_17, %c0_18] : memref<1x1x128xf32, #tpu.memory_space<vmem>>, vector<1x1x128xf32>
    %33 = vector.shape_cast %32 : vector<1x1x128xf32> to vector<1x128xf32>
    %34 = vector.broadcast %33 : vector<1x128xf32> to vector<16x128xf32>
    %35 = arith.addf %31, %34 : vector<16x128xf32>
    %cst_19 = arith.constant 0.000000e+00 : f32
    %36 = vector.broadcast %cst_19 : f32 to vector<16x128xf32>
    %37 = arith.maximumf %35, %36 : vector<16x128xf32>
    %38 = arith.truncf %37 : vector<16x128xf32> to vector<16x128xbf16>
    %c0_20 = arith.constant 0 : index
    %c0_21 = arith.constant 0 : index
    %c0_22 = arith.constant 0 : index
    %39 = vector.load %arg5[%c0_20, %c0_21, %c0_22] : memref<1x128x128xbf16, #tpu.memory_space<vmem>>, vector<1x128x128xbf16>
    %40 = vector.shape_cast %39 : vector<1x128x128xbf16> to vector<128x128xbf16>
    %cst_23 = arith.constant dense<0.000000e+00> : vector<16x128xf32>
    %41 = tpu.matmul %38, %40, %cst_23 {dimension_numbers = #tpu.dot_dimension_numbers<[1], [0], [0], [1], [0, 0, 1, 1], [], []>} : vector<16x128xbf16>, vector<128x128xbf16>, vector<16x128xf32> -> vector<16x128xf32>
    %cst_24 = arith.constant dense<0.000000e+00> : vector<128xf32>
    %42 = vector.multi_reduction <add>, %41, %cst_24 [0] : vector<16x128xf32> to vector<128xf32>
    %43 = vector.shape_cast %42 : vector<128xf32> to vector<1x128xf32>
    %cst_25 = arith.constant 6.250000e-02 : f32
    %44 = vector.broadcast %cst_25 : f32 to vector<1x128xf32>
    %45 = arith.mulf %43, %44 : vector<1x128xf32>
    %46 = vector.broadcast %45 : vector<1x128xf32> to vector<16x128xf32>
    %47 = arith.subf %41, %46 : vector<16x128xf32>
    %48 = arith.mulf %47, %47 : vector<16x128xf32>
    %cst_26 = arith.constant dense<0.000000e+00> : vector<128xf32>
    %49 = vector.multi_reduction <add>, %48, %cst_26 [0] : vector<16x128xf32> to vector<128xf32>
    %50 = vector.shape_cast %49 : vector<128xf32> to vector<1x128xf32>
    %cst_27 = arith.constant 6.250000e-02 : f32
    %51 = vector.broadcast %cst_27 : f32 to vector<1x128xf32>
    %52 = arith.mulf %50, %51 : vector<1x128xf32>
    %cst_28 = arith.constant 9.99999974E-6 : f32
    %53 = vector.broadcast %cst_28 : f32 to vector<1x128xf32>
    %54 = arith.addf %52, %53 : vector<1x128xf32>
    %55 = math.rsqrt %54 : vector<1x128xf32>
    %56 = vector.broadcast %55 : vector<1x128xf32> to vector<16x128xf32>
    %57 = arith.mulf %47, %56 : vector<16x128xf32>
    %c0_29 = arith.constant 0 : index
    %c0_30 = arith.constant 0 : index
    %c0_31 = arith.constant 0 : index
    %58 = vector.load %arg8[%c0_29, %c0_30, %c0_31] : memref<1x1x128xf32, #tpu.memory_space<vmem>>, vector<1x1x128xf32>
    %59 = vector.shape_cast %58 : vector<1x1x128xf32> to vector<1x128xf32>
    %60 = vector.broadcast %59 : vector<1x128xf32> to vector<16x128xf32>
    %61 = arith.mulf %57, %60 : vector<16x128xf32>
    %c0_32 = arith.constant 0 : index
    %c0_33 = arith.constant 0 : index
    %c0_34 = arith.constant 0 : index
    %62 = vector.load %arg9[%c0_32, %c0_33, %c0_34] : memref<1x1x128xf32, #tpu.memory_space<vmem>>, vector<1x1x128xf32>
    %63 = vector.shape_cast %62 : vector<1x1x128xf32> to vector<1x128xf32>
    %64 = vector.broadcast %63 : vector<1x128xf32> to vector<16x128xf32>
    %65 = arith.addf %61, %64 : vector<16x128xf32>
    %cst_35 = arith.constant 0.000000e+00 : f32
    %66 = vector.broadcast %cst_35 : f32 to vector<16x128xf32>
    %67 = arith.maximumf %65, %66 : vector<16x128xf32>
    %c0_36 = arith.constant 0 : index
    %c0_37 = arith.constant 0 : index
    %68 = vector.load %arg10[%c0_36, %c0_37] : memref<16x128xf32, #tpu.memory_space<vmem>>, vector<16x128xf32>
    tpu.vector_store %arg10[%c0_36, %c0_37], %67 {strides = array<i32>} : memref<16x128xf32, #tpu.memory_space<vmem>>, vector<16x128xf32>,
    %c0_38 = arith.constant 0 : index
    %c0_39 = arith.constant 0 : index
    %69 = vector.load %arg2[%c0_38, %c0_39] : memref<2x16xbf16, #tpu.memory_space<vmem>>, vector<2x16xbf16>
    %70 = arith.truncf %67 : vector<16x128xf32> to vector<16x128xbf16>
    %cst_40 = arith.constant dense<0.000000e+00> : vector<2x128xf32>
    %71 = tpu.matmul %69, %70, %cst_40 {dimension_numbers = #tpu.dot_dimension_numbers<[1], [0], [0], [1], [0, 0, 1, 1], [], []>} : vector<2x16xbf16>, vector<16x128xbf16>, vector<2x128xf32> -> vector<2x128xf32>
    %c0_41 = arith.constant 0 : index
    %c0_42 = arith.constant 0 : index
    %72 = vector.load %arg11[%c0_41, %c0_42] : memref<2x128xf32, #tpu.memory_space<vmem>>, vector<2x128xf32>
    tpu.vector_store %arg11[%c0_41, %c0_42], %71 {strides = array<i32>} : memref<2x128xf32, #tpu.memory_space<vmem>>, vector<2x128xf32>,
    return
  }
  func.func @transform_0(%arg0: i32) -> (i32, i32) {
    %c0_i32 = arith.constant 0 : i32
    %c0_i32_0 = arith.constant 0 : i32
    %c0_i32_1 = arith.constant 0 : i32
    return %c0_i32, %c0_i32_0 : i32, i32
  }
  func.func @transform_1(%arg0: i32) -> (i32, i32) {
    %c0_i32 = arith.constant 0 : i32
    %c0_i32_0 = arith.constant 0 : i32
    %c0_i32_1 = arith.constant 0 : i32
    return %c0_i32, %c0_i32_0 : i32, i32
  }
  func.func @transform_2(%arg0: i32) -> (i32, i32) {
    %c0_i32 = arith.constant 0 : i32
    %c0_i32_0 = arith.constant 0 : i32
    %c0_i32_1 = arith.constant 0 : i32
    return %c0_i32, %c0_i32_0 : i32, i32
  }
  func.func @transform_3(%arg0: i32) -> (i32, i32, i32) {
    %c0_i32 = arith.constant 0 : i32
    %c0_i32_0 = arith.constant 0 : i32
    %c0_i32_1 = arith.constant 0 : i32
    return %arg0, %c0_i32, %c0_i32_0 : i32, i32, i32
  }
  func.func @transform_4(%arg0: i32) -> (i32, i32, i32) {
    %c0_i32 = arith.constant 0 : i32
    %c0_i32_0 = arith.constant 0 : i32
    %c0_i32_1 = arith.constant 0 : i32
    return %arg0, %c0_i32, %c0_i32_0 : i32, i32, i32
  }
  func.func @transform_5(%arg0: i32) -> (i32, i32, i32) {
    %c0_i32 = arith.constant 0 : i32
    %c0_i32_0 = arith.constant 0 : i32
    %c0_i32_1 = arith.constant 0 : i32
    return %arg0, %c0_i32, %c0_i32_0 : i32, i32, i32
  }
  func.func @transform_6(%arg0: i32) -> (i32, i32, i32) {
    %c0_i32 = arith.constant 0 : i32
    %c0_i32_0 = arith.constant 0 : i32
    %c0_i32_1 = arith.constant 0 : i32
    return %arg0, %c0_i32, %c0_i32_0 : i32, i32, i32
  }
  func.func @transform_7(%arg0: i32) -> (i32, i32, i32) {
    %c0_i32 = arith.constant 0 : i32
    %c0_i32_0 = arith.constant 0 : i32
    %c0_i32_1 = arith.constant 0 : i32
    return %arg0, %c0_i32, %c0_i32_0 : i32, i32, i32
  }
  func.func @transform_8(%arg0: i32) -> (i32, i32, i32) {
    %c0_i32 = arith.constant 0 : i32
    %c0_i32_0 = arith.constant 0 : i32
    %c0_i32_1 = arith.constant 0 : i32
    return %arg0, %c0_i32, %c0_i32_0 : i32, i32, i32
  }
  func.func @transform_9(%arg0: i32) -> (i32, i32) {
    %c0_i32 = arith.constant 0 : i32
    %c0_i32_0 = arith.constant 0 : i32
    %c0_i32_1 = arith.constant 0 : i32
    return %c0_i32, %c0_i32_0 : i32, i32
  }
  func.func @transform_10(%arg0: i32) -> (i32, i32) {
    %c0_i32 = arith.constant 0 : i32
    %c0_i32_0 = arith.constant 0 : i32
    return %c0_i32, %arg0 : i32, i32
  }
}

module attributes {stable_mosaic.version = 11 : i64} {
  func.func @_encoder1_kernel(%arg0: i32, %arg1: memref<16x16xbf16, #tpu.memory_space<vmem>>, %arg2: memref<2x16xbf16, #tpu.memory_space<vmem>>, %arg3: memref<16x128xf32, #tpu.memory_space<vmem>>, %arg4: memref<1x128x128xbf16, #tpu.memory_space<vmem>>, %arg5: memref<1x128x128xbf16, #tpu.memory_space<vmem>>, %arg6: memref<1x1x128xf32, #tpu.memory_space<vmem>>, %arg7: memref<1x1x128xf32, #tpu.memory_space<vmem>>, %arg8: memref<1x1x128xf32, #tpu.memory_space<vmem>>, %arg9: memref<1x1x128xf32, #tpu.memory_space<vmem>>, %arg10: memref<16x128xf32, #tpu.memory_space<vmem>>, %arg11: memref<2x128xf32, #tpu.memory_space<vmem>>) attributes {dimension_semantics = [#tpu.dimension_semantics<arbitrary>], iteration_bounds = array<i64: 2>, scalar_prefetch = 0 : i64, scratch_operands = 0 : i64, tpu.core_type = #tpu.core_type<tc>, window_params = [{pipeline_mode = #tpu.pipeline_mode<synchronous>, transform_indices = @transform_0, window_bounds = array<i64: 16, 16>}, {pipeline_mode = #tpu.pipeline_mode<synchronous>, transform_indices = @transform_1, window_bounds = array<i64: 2, 16>}, {pipeline_mode = #tpu.pipeline_mode<synchronous>, transform_indices = @transform_2, window_bounds = array<i64: 16, 128>}, {transform_indices = @transform_3, window_bounds = array<i64: 1, 128, 128>}, {transform_indices = @transform_4, window_bounds = array<i64: 1, 128, 128>}, {transform_indices = @transform_5, window_bounds = array<i64: 1, 1, 128>}, {transform_indices = @transform_6, window_bounds = array<i64: 1, 1, 128>}, {transform_indices = @transform_7, window_bounds = array<i64: 1, 1, 128>}, {transform_indices = @transform_8, window_bounds = array<i64: 1, 1, 128>}, {pipeline_mode = #tpu.pipeline_mode<synchronous>, transform_indices = @transform_9, window_bounds = array<i64: 16, 128>}, {transform_indices = @transform_10, window_bounds = array<i64: 2, 128>}]} {
    %c0_i32 = arith.constant 0 : i32
    %0 = arith.cmpi eq, %arg0, %c0_i32 : i32
    %1 = arith.extui %0 : i1 to i32
    %c0_i32_0 = arith.constant 0 : i32
    %2 = arith.cmpi ne, %1, %c0_i32_0 : i32
    scf.if %2 {
      %c0_43 = arith.constant 0 : index
      %c0_44 = arith.constant 0 : index
      %73 = vector.load %arg3[%c0_43, %c0_44] : memref<16x128xf32, #tpu.memory_space<vmem>>, vector<16x128xf32>
      %c0_45 = arith.constant 0 : index
      %c0_46 = arith.constant 0 : index
      %74 = vector.load %arg10[%c0_45, %c0_46] : memref<16x128xf32, #tpu.memory_space<vmem>>, vector<16x128xf32>
      tpu.vector_store %arg10[%c0_45, %c0_46], %73 {strides = array<i32>} : memref<16x128xf32, #tpu.memory_space<vmem>>, vector<16x128xf32>,
    } else {
    }
    %c0 = arith.constant 0 : index
    %c0_1 = arith.constant 0 : index
    %3 = vector.load %arg10[%c0, %c0_1] : memref<16x128xf32, #tpu.memory_space<vmem>>, vector<16x128xf32>
    %c0_2 = arith.constant 0 : index
    %c0_3 = arith.constant 0 : index
    %4 = vector.load %arg1[%c0_2, %c0_3] : memref<16x16xbf16, #tpu.memory_space<vmem>>, vector<16x16xbf16>
    %5 = arith.truncf %3 : vector<16x128xf32> to vector<16x128xbf16>
    %cst = arith.constant dense<0.000000e+00> : vector<16x128xf32>
    %6 = tpu.matmul %4, %5, %cst {dimension_numbers = #tpu.dot_dimension_numbers<[1], [0], [0], [1], [0, 0, 1, 1], [], []>} : vector<16x16xbf16>, vector<16x128xbf16>, vector<16x128xf32> -> vector<16x128xf32>
    %7 = arith.addf %3, %6 : vector<16x128xf32>
    %8 = arith.truncf %7 : vector<16x128xf32> to vector<16x128xbf16>
    %c0_4 = arith.constant 0 : index
    %c0_5 = arith.constant 0 : index
    %c0_6 = arith.constant 0 : index
    %9 = vector.load %arg4[%c0_4, %c0_5, %c0_6] : memref<1x128x128xbf16, #tpu.memory_space<vmem>>, vector<1x128x128xbf16>
    %10 = vector.shape_cast %9 : vector<1x128x128xbf16> to vector<128x128xbf16>
    %cst_7 = arith.constant dense<0.000000e+00> : vector<16x128xf32>
    %11 = tpu.matmul %8, %10, %cst_7 {dimension_numbers = #tpu.dot_dimension_numbers<[1], [0], [0], [1], [0, 0, 1, 1], [], []>} : vector<16x128xbf16>, vector<128x128xbf16>, vector<16x128xf32> -> vector<16x128xf32>
    %cst_8 = arith.constant dense<0.000000e+00> : vector<128xf32>
    %12 = vector.multi_reduction <add>, %11, %cst_8 [0] : vector<16x128xf32> to vector<128xf32>
    %13 = vector.shape_cast %12 : vector<128xf32> to vector<1x128xf32>
    %cst_9 = arith.constant 6.250000e-02 : f32
    %14 = vector.broadcast %cst_9 : f32 to vector<1x128xf32>
    %15 = arith.mulf %13, %14 : vector<1x128xf32>
    %16 = vector.broadcast %15 : vector<1x128xf32> to vector<16x128xf32>
    %17 = arith.subf %11, %16 : vector<16x128xf32>
    %18 = arith.mulf %17, %17 : vector<16x128xf32>
    %cst_10 = arith.constant dense<0.000000e+00> : vector<128xf32>
    %19 = vector.multi_reduction <add>, %18, %cst_10 [0] : vector<16x128xf32> to vector<128xf32>
    %20 = vector.shape_cast %19 : vector<128xf32> to vector<1x128xf32>
    %cst_11 = arith.constant 6.250000e-02 : f32
    %21 = vector.broadcast %cst_11 : f32 to vector<1x128xf32>
    %22 = arith.mulf %20, %21 : vector<1x128xf32>
    %cst_12 = arith.constant 9.99999974E-6 : f32
    %23 = vector.broadcast %cst_12 : f32 to vector<1x128xf32>
    %24 = arith.addf %22, %23 : vector<1x128xf32>
    %25 = math.rsqrt %24 : vector<1x128xf32>
    %26 = vector.broadcast %25 : vector<1x128xf32> to vector<16x128xf32>
    %27 = arith.mulf %17, %26 : vector<16x128xf32>
    %c0_13 = arith.constant 0 : index
    %c0_14 = arith.constant 0 : index
    %c0_15 = arith.constant 0 : index
    %28 = vector.load %arg6[%c0_13, %c0_14, %c0_15] : memref<1x1x128xf32, #tpu.memory_space<vmem>>, vector<1x1x128xf32>
    %29 = vector.shape_cast %28 : vector<1x1x128xf32> to vector<1x128xf32>
    %30 = vector.broadcast %29 : vector<1x128xf32> to vector<16x128xf32>
    %31 = arith.mulf %27, %30 : vector<16x128xf32>
    %c0_16 = arith.constant 0 : index
    %c0_17 = arith.constant 0 : index
    %c0_18 = arith.constant 0 : index
    %32 = vector.load %arg7[%c0_16, %c0_17, %c0_18] : memref<1x1x128xf32, #tpu.memory_space<vmem>>, vector<1x1x128xf32>
    %33 = vector.shape_cast %32 : vector<1x1x128xf32> to vector<1x128xf32>
    %34 = vector.broadcast %33 : vector<1x128xf32> to vector<16x128xf32>
    %35 = arith.addf %31, %34 : vector<16x128xf32>
    %cst_19 = arith.constant 0.000000e+00 : f32
    %36 = vector.broadcast %cst_19 : f32 to vector<16x128xf32>
    %37 = arith.maximumf %35, %36 : vector<16x128xf32>
    %38 = arith.truncf %37 : vector<16x128xf32> to vector<16x128xbf16>
    %c0_20 = arith.constant 0 : index
    %c0_21 = arith.constant 0 : index
    %c0_22 = arith.constant 0 : index
    %39 = vector.load %arg5[%c0_20, %c0_21, %c0_22] : memref<1x128x128xbf16, #tpu.memory_space<vmem>>, vector<1x128x128xbf16>
    %40 = vector.shape_cast %39 : vector<1x128x128xbf16> to vector<128x128xbf16>
    %cst_23 = arith.constant dense<0.000000e+00> : vector<16x128xf32>
    %41 = tpu.matmul %38, %40, %cst_23 {dimension_numbers = #tpu.dot_dimension_numbers<[1], [0], [0], [1], [0, 0, 1, 1], [], []>} : vector<16x128xbf16>, vector<128x128xbf16>, vector<16x128xf32> -> vector<16x128xf32>
    %cst_24 = arith.constant dense<0.000000e+00> : vector<128xf32>
    %42 = vector.multi_reduction <add>, %41, %cst_24 [0] : vector<16x128xf32> to vector<128xf32>
    %43 = vector.shape_cast %42 : vector<128xf32> to vector<1x128xf32>
    %cst_25 = arith.constant 6.250000e-02 : f32
    %44 = vector.broadcast %cst_25 : f32 to vector<1x128xf32>
    %45 = arith.mulf %43, %44 : vector<1x128xf32>
    %46 = vector.broadcast %45 : vector<1x128xf32> to vector<16x128xf32>
    %47 = arith.subf %41, %46 : vector<16x128xf32>
    %48 = arith.mulf %47, %47 : vector<16x128xf32>
    %cst_26 = arith.constant dense<0.000000e+00> : vector<128xf32>
    %49 = vector.multi_reduction <add>, %48, %cst_26 [0] : vector<16x128xf32> to vector<128xf32>
    %50 = vector.shape_cast %49 : vector<128xf32> to vector<1x128xf32>
    %cst_27 = arith.constant 6.250000e-02 : f32
    %51 = vector.broadcast %cst_27 : f32 to vector<1x128xf32>
    %52 = arith.mulf %50, %51 : vector<1x128xf32>
    %cst_28 = arith.constant 9.99999974E-6 : f32
    %53 = vector.broadcast %cst_28 : f32 to vector<1x128xf32>
    %54 = arith.addf %52, %53 : vector<1x128xf32>
    %55 = math.rsqrt %54 : vector<1x128xf32>
    %56 = vector.broadcast %55 : vector<1x128xf32> to vector<16x128xf32>
    %57 = arith.mulf %47, %56 : vector<16x128xf32>
    %c0_29 = arith.constant 0 : index
    %c0_30 = arith.constant 0 : index
    %c0_31 = arith.constant 0 : index
    %58 = vector.load %arg8[%c0_29, %c0_30, %c0_31] : memref<1x1x128xf32, #tpu.memory_space<vmem>>, vector<1x1x128xf32>
    %59 = vector.shape_cast %58 : vector<1x1x128xf32> to vector<1x128xf32>
    %60 = vector.broadcast %59 : vector<1x128xf32> to vector<16x128xf32>
    %61 = arith.mulf %57, %60 : vector<16x128xf32>
    %c0_32 = arith.constant 0 : index
    %c0_33 = arith.constant 0 : index
    %c0_34 = arith.constant 0 : index
    %62 = vector.load %arg9[%c0_32, %c0_33, %c0_34] : memref<1x1x128xf32, #tpu.memory_space<vmem>>, vector<1x1x128xf32>
    %63 = vector.shape_cast %62 : vector<1x1x128xf32> to vector<1x128xf32>
    %64 = vector.broadcast %63 : vector<1x128xf32> to vector<16x128xf32>
    %65 = arith.addf %61, %64 : vector<16x128xf32>
    %cst_35 = arith.constant 0.000000e+00 : f32
    %66 = vector.broadcast %cst_35 : f32 to vector<16x128xf32>
    %67 = arith.maximumf %65, %66 : vector<16x128xf32>
    %c0_36 = arith.constant 0 : index
    %c0_37 = arith.constant 0 : index
    %68 = vector.load %arg10[%c0_36, %c0_37] : memref<16x128xf32, #tpu.memory_space<vmem>>, vector<16x128xf32>
    tpu.vector_store %arg10[%c0_36, %c0_37], %67 {strides = array<i32>} : memref<16x128xf32, #tpu.memory_space<vmem>>, vector<16x128xf32>,
    %c0_38 = arith.constant 0 : index
    %c0_39 = arith.constant 0 : index
    %69 = vector.load %arg2[%c0_38, %c0_39] : memref<2x16xbf16, #tpu.memory_space<vmem>>, vector<2x16xbf16>
    %70 = arith.truncf %67 : vector<16x128xf32> to vector<16x128xbf16>
    %cst_40 = arith.constant dense<0.000000e+00> : vector<2x128xf32>
    %71 = tpu.matmul %69, %70, %cst_40 {dimension_numbers = #tpu.dot_dimension_numbers<[1], [0], [0], [1], [0, 0, 1, 1], [], []>} : vector<2x16xbf16>, vector<16x128xbf16>, vector<2x128xf32> -> vector<2x128xf32>
    %c0_41 = arith.constant 0 : index
    %c0_42 = arith.constant 0 : index
    %72 = vector.load %arg11[%c0_41, %c0_42] : memref<2x128xf32, #tpu.memory_space<vmem>>, vector<2x128xf32>
    tpu.vector_store %arg11[%c0_41, %c0_42], %71 {strides = array<i32>} : memref<2x128xf32, #tpu.memory_space<vmem>>, vector<2x128xf32>,
    return
  }
  func.func @transform_0(%arg0: i32) -> (i32, i32) {
    %c0_i32 = arith.constant 0 : i32
    %c0_i32_0 = arith.constant 0 : i32
    %c0_i32_1 = arith.constant 0 : i32
    return %c0_i32, %c0_i32_0 : i32, i32
  }
  func.func @transform_1(%arg0: i32) -> (i32, i32) {
    %c0_i32 = arith.constant 0 : i32
    %c0_i32_0 = arith.constant 0 : i32
    %c0_i32_1 = arith.constant 0 : i32
    return %c0_i32, %c0_i32_0 : i32, i32
  }
  func.func @transform_2(%arg0: i32) -> (i32, i32) {
    %c0_i32 = arith.constant 0 : i32
    %c0_i32_0 = arith.constant 0 : i32
    %c0_i32_1 = arith.constant 0 : i32
    return %c0_i32, %c0_i32_0 : i32, i32
  }
  func.func @transform_3(%arg0: i32) -> (i32, i32, i32) {
    %c0_i32 = arith.constant 0 : i32
    %c0_i32_0 = arith.constant 0 : i32
    %c0_i32_1 = arith.constant 0 : i32
    return %arg0, %c0_i32, %c0_i32_0 : i32, i32, i32
  }
  func.func @transform_4(%arg0: i32) -> (i32, i32, i32) {
    %c0_i32 = arith.constant 0 : i32
    %c0_i32_0 = arith.constant 0 : i32
    %c0_i32_1 = arith.constant 0 : i32
    return %arg0, %c0_i32, %c0_i32_0 : i32, i32, i32
  }
  func.func @transform_5(%arg0: i32) -> (i32, i32, i32) {
    %c0_i32 = arith.constant 0 : i32
    %c0_i32_0 = arith.constant 0 : i32
    %c0_i32_1 = arith.constant 0 : i32
    return %arg0, %c0_i32, %c0_i32_0 : i32, i32, i32
  }
  func.func @transform_6(%arg0: i32) -> (i32, i32, i32) {
    %c0_i32 = arith.constant 0 : i32
    %c0_i32_0 = arith.constant 0 : i32
    %c0_i32_1 = arith.constant 0 : i32
    return %arg0, %c0_i32, %c0_i32_0 : i32, i32, i32
  }
  func.func @transform_7(%arg0: i32) -> (i32, i32, i32) {
    %c0_i32 = arith.constant 0 : i32
    %c0_i32_0 = arith.constant 0 : i32
    %c0_i32_1 = arith.constant 0 : i32
    return %arg0, %c0_i32, %c0_i32_0 : i32, i32, i32
  }
  func.func @transform_8(%arg0: i32) -> (i32, i32, i32) {
    %c0_i32 = arith.constant 0 : i32
    %c0_i32_0 = arith.constant 0 : i32
    %c0_i32_1 = arith.constant 0 : i32
    return %arg0, %c0_i32, %c0_i32_0 : i32, i32, i32
  }
  func.func @transform_9(%arg0: i32) -> (i32, i32) {
    %c0_i32 = arith.constant 0 : i32
    %c0_i32_0 = arith.constant 0 : i32
    %c0_i32_1 = arith.constant 0 : i32
    return %c0_i32, %c0_i32_0 : i32, i32
  }
  func.func @transform_10(%arg0: i32) -> (i32, i32) {
    %c0_i32 = arith.constant 0 : i32
    %c0_i32_0 = arith.constant 0 : i32
    return %c0_i32, %arg0 : i32, i32
  }
}

</mosaic_0001>

<llo_original>
// kernel: tpu_custom_call.1
$region0: #{tpu_custom_call.1}
  #allocation0 [shape = 'u32[]', space=smem, size = 0x4, offset = 0x4, fixed_abs, tag = 'smem constant byte address 0x4 - core index']
  #allocation1 [shape = 'u32[144,128]{1,0:T(1,128)}', space=vmem, size = 0x12000, scoped, tag = 'internal scratch']
  %s0 = inlined_call_operand.hbm [shape: bf16[16,16], index: 0, kind: input, shape index: {}]
  %s1 = inlined_call_operand.vmem [shape: bf16[2,16], index: 1, kind: input, shape index: {}]
  %s2 = inlined_call_operand.hbm [shape: f32[16,128], index: 2, kind: input, shape index: {}]
  %s3 = inlined_call_operand.hbm [shape: bf16[2,128,128], index: 3, kind: input, shape index: {}]
  %s4 = inlined_call_operand.hbm [shape: bf16[2,128,128], index: 4, kind: input, shape index: {}]
  %s5 = inlined_call_operand.vmem [shape: f32[2,1,128], index: 5, kind: input, shape index: {}]
  %s6 = inlined_call_operand.vmem [shape: f32[2,1,128], index: 6, kind: input, shape index: {}]
  %s7 = inlined_call_operand.vmem [shape: f32[2,1,128], index: 7, kind: input, shape index: {}]
  %s8 = inlined_call_operand.vmem [shape: f32[2,1,128], index: 8, kind: input, shape index: {}]
  %s9 = inlined_call_operand.hbm [shape: f32[16,128], index: 9, kind: output, shape index: {0}]
  %s10 = inlined_call_operand.hbm [shape: f32[2,256], index: 10, kind: output, shape index: {1}]
  %11 = xla_tuple %s9, %s10
  %s12 = sld [smem:[#allocation0]]
  $region97: #{tpu_custom_call.1} parent=0
    _
  %s14 = ssub.s32 1, %s12
  %s15 = scalar_select 0, %s14, %s12
  $region1: #{tpu_custom_call.1} parent=0
    #allocation2 [shape = 'u8[4096]{0}', space=vmem, size = 0x1000, scoped, tag = 'input window, operand 0, single buffered']
    #allocation3 [shape = 's32[2]{0}', space=sflag, size = 0x8, scoped, tag = 'scoped memory for tpu_custom_call.1']
    #allocation4 [shape = 's32[2]{0}', space=sflag, size = 0x8, scoped, tag = 'scoped memory for tpu_custom_call.1']
    #allocation5 [shape = 'u8[8192]{0}', space=vmem, size = 0x2000, scoped, tag = 'input window, operand 2, single buffered']
    #allocation6 [shape = 's32[1]{0}', space=sflag, size = 0x4, scoped, tag = 'scoped memory for tpu_custom_call.1']
    #allocation7 [shape = 'u8[65536]{0}', space=vmem, size = 0x10000, scoped, tag = 'input window, operand 3']
    #allocation8 [shape = 'u8[65536]{0}', space=vmem, size = 0x10000, scoped, tag = 'input window, operand 4']
    #allocation9 [shape = 'u8[8192]{0}', space=vmem, size = 0x2000, scoped, tag = 'output window, operand 0, single buffered']
    #allocation10 [shape = 'u8[2048]{0}', space=vmem, size = 0x800, scoped, tag = 'output window, operand 1']
    #allocation11 [shape = 's32[2]{0}', space=sflag, size = 0x8, scoped, tag = 'scoped memory for tpu_custom_call.1']
    %16 = vsyncpa [#allocation3], 0
    %17 = vsyncpa [#allocation6], 0
    %18 = vsyncpa [#allocation4], 0
    %19 = vsyncpa [#allocation11], 0
    %s20 = scalar_lea.sflag [#allocation11], 1
    %21 = vsyncpa %s20, 0
    loop: start=0, step=1, limit=4
    $region2: #{tpu_custom_call.1} parent=1 // loop_pre_header
      _
    $region3: #{tpu_custom_call.1} parent=1 // loop_header
      %s23 = sphi 0, %s27
      %p24 = scmp.ge.s32.totalorder %s23, 4
      %s31 = sphi 0, %s31
      %s33 = sphi 0, %s31
      %s34 = sphi 0, %s33
      %s48 = sphi 0, %s34
      %s52 = sphi 0, %s52
      %s54 = sphi 0, %s52
      %s55 = sphi 0, %s54
      %s69 = sphi 0, %s55
      %s73 = sphi 0, %s73
      %s75 = sphi 0, %s73
      %s76 = sphi 0, %s75
      %s90 = sphi 0, %s76
      %s96 = sphi 0, %s98
      %s99 = sphi 0, %s96
      %s100 = sphi 0, %s99
      %s116 = sphi 0, %s100
      %s122 = sphi 0, %s124
      %s125 = sphi 0, %s122
      %s126 = sphi 0, %s125
      %s142 = sphi 0, %s126
      %s148 = sphi 0, %s150
      %s151 = sphi 0, %s148
      %s152 = sphi 0, %s151
      %s168 = sphi 0, %s152
      %s174 = sphi 0, %s176
      %s177 = sphi 0, %s174
      %s178 = sphi 0, %s177
      %s194 = sphi 0, %s178
      %s200 = sphi 0, %s202
      %s203 = sphi 0, %s200
      %s204 = sphi 0, %s203
      %s220 = sphi 0, %s204
      %s226 = sphi 0, %s228
      %s229 = sphi 0, %s226
      %s230 = sphi 0, %s229
      %s246 = sphi 0, %s230
      %s250 = sphi 0, %s250
      %s252 = sphi 0, %s250
      %s253 = sphi 0, %s252
      %s267 = sphi 0, %s253
      %s273 = sphi 0, %s275
      %s276 = sphi 0, %s273
      %s277 = sphi 0, %s276
      %s293 = sphi 0, %s277
    $region4: #{tpu_custom_call.1} parent=1 // loop_header_branch
      %26 = sbr.rel (%p24) target = $region8
    $region5: #{tpu_custom_call.1} parent=1 // loop_body
      %s28 = ssub.s32 %s23, 1
      %s29 = ssub.s32 %s23, 2
      %s30 = sadd.s32 %s23, 1
      %s32 = sadd.s32 %s31, 1
      %p35 = scmp.eq.s32.totalorder %s23, 1
      %p36 = scmp.ne.s32.totalorder %s31, %s33
      %p37 = scmp.eq.s32.totalorder %s23, 0
      %p38 = por %p36, %p37
      %p39 = scmp.ne.s32.totalorder %s31, %s33
      %p40 = scmp.eq.s32.totalorder %s28, 1
      %p41 = por %p39, %p40
      %p42 = scmp.ne.s32.totalorder %s33, %s34
      %p43 = scmp.eq.s32.totalorder %s28, 0
      %p44 = por %p42, %p43
      %p45 = scmp.ne.s32.totalorder %s33, %s34
      %p46 = scmp.eq.s32.totalorder %s29, 1
      %p47 = por %p45, %p46
      %p49 = scmp.ne.s32.totalorder %s34, %s48
      %p50 = scmp.eq.s32.totalorder %s29, 0
      %p51 = por %p49, %p50
      %s53 = sadd.s32 %s52, 1
      %p56 = scmp.eq.s32.totalorder %s23, 1
      %p57 = scmp.ne.s32.totalorder %s52, %s54
      %p58 = scmp.eq.s32.totalorder %s23, 0
      %p59 = por %p57, %p58
      %p60 = scmp.ne.s32.totalorder %s52, %s54
      %p61 = scmp.eq.s32.totalorder %s28, 1
      %p62 = por %p60, %p61
      %p63 = scmp.ne.s32.totalorder %s54, %s55
      %p64 = scmp.eq.s32.totalorder %s28, 0
      %p65 = por %p63, %p64
      %p66 = scmp.ne.s32.totalorder %s54, %s55
      %p67 = scmp.eq.s32.totalorder %s29, 1
      %p68 = por %p66, %p67
      %p70 = scmp.ne.s32.totalorder %s55, %s69
      %p71 = scmp.eq.s32.totalorder %s29, 0
      %p72 = por %p70, %p71
      %s74 = sadd.s32 %s73, 1
      %p77 = scmp.eq.s32.totalorder %s23, 1
      %p78 = scmp.ne.s32.totalorder %s73, %s75
      %p79 = scmp.eq.s32.totalorder %s23, 0
      %p80 = por %p78, %p79
      %p81 = scmp.ne.s32.totalorder %s73, %s75
      %p82 = scmp.eq.s32.totalorder %s28, 1
      %p83 = por %p81, %p82
      %p84 = scmp.ne.s32.totalorder %s75, %s76
      %p85 = scmp.eq.s32.totalorder %s28, 0
      %p86 = por %p84, %p85
      %p87 = scmp.ne.s32.totalorder %s75, %s76
      %p88 = scmp.eq.s32.totalorder %s29, 1
      %p89 = por %p87, %p88
      %p91 = scmp.ne.s32.totalorder %s76, %s90
      %p92 = scmp.eq.s32.totalorder %s29, 0
      %p93 = por %p91, %p92
      %s94 = ssub.s32 %s23, %s30
      %p95 = scmp.eq.s32.totalorder %s94, 0
      %s97 = sadd.s32 %s96, 1
      %s98 = scalar_select %p95, %s96, %s97
      %p101 = pneg %p95
      %p102 = scmp.eq.s32.totalorder %s23, 1
      %p103 = por %p101, %p102
      %p104 = scmp.ne.s32.totalorder %s96, %s99
      %p105 = scmp.eq.s32.totalorder %s23, 0
      %p106 = por %p104, %p105
      %p107 = scmp.ne.s32.totalorder %s96, %s99
      %p108 = scmp.eq.s32.totalorder %s28, 1
      %p109 = por %p107, %p108
      %p110 = scmp.ne.s32.totalorder %s99, %s100
      %p111 = scmp.eq.s32.totalorder %s28, 0
      %p112 = por %p110, %p111
      %p113 = scmp.ne.s32.totalorder %s99, %s100
      %p114 = scmp.eq.s32.totalorder %s29, 1
      %p115 = por %p113, %p114
      %p117 = scmp.ne.s32.totalorder %s100, %s116
      %p118 = scmp.eq.s32.totalorder %s29, 0
      %p119 = por %p117, %p118
      %s120 = ssub.s32 %s23, %s30
      %p121 = scmp.eq.s32.totalorder %s120, 0
      %s123 = sadd.s32 %s122, 1
      %s124 = scalar_select %p121, %s122, %s123
      %p127 = pneg %p121
      %p128 = scmp.eq.s32.totalorder %s23, 1
      %p129 = por %p127, %p128
      %p130 = scmp.ne.s32.totalorder %s122, %s125
      %p131 = scmp.eq.s32.totalorder %s23, 0
      %p132 = por %p130, %p131
      %p133 = scmp.ne.s32.totalorder %s122, %s125
      %p134 = scmp.eq.s32.totalorder %s28, 1
      %p135 = por %p133, %p134
      %p136 = scmp.ne.s32.totalorder %s125, %s126
      %p137 = scmp.eq.s32.totalorder %s28, 0
      %p138 = por %p136, %p137
      %p139 = scmp.ne.s32.totalorder %s125, %s126
      %p140 = scmp.eq.s32.totalorder %s29, 1
      %p141 = por %p139, %p140
      %p143 = scmp.ne.s32.totalorder %s126, %s142
      %p144 = scmp.eq.s32.totalorder %s29, 0
      %p145 = por %p143, %p144
      %s146 = ssub.s32 %s23, %s30
      %p147 = scmp.eq.s32.totalorder %s146, 0
      %s149 = sadd.s32 %s148, 1
      %s150 = scalar_select %p147, %s148, %s149
      %p153 = pneg %p147
      %p154 = scmp.eq.s32.totalorder %s23, 1
      %p155 = por %p153, %p154
      %p156 = scmp.ne.s32.totalorder %s148, %s151
      %p157 = scmp.eq.s32.totalorder %s23, 0
      %p158 = por %p156, %p157
      %p159 = scmp.ne.s32.totalorder %s148, %s151
      %p160 = scmp.eq.s32.totalorder %s28, 1
      %p161 = por %p159, %p160
      %p162 = scmp.ne.s32.totalorder %s151, %s152
      %p163 = scmp.eq.s32.totalorder %s28, 0
      %p164 = por %p162, %p163
      %p165 = scmp.ne.s32.totalorder %s151, %s152
      %p166 = scmp.eq.s32.totalorder %s29, 1
      %p167 = por %p165, %p166
      %p169 = scmp.ne.s32.totalorder %s152, %s168
      %p170 = scmp.eq.s32.totalorder %s29, 0
      %p171 = por %p169, %p170
      %s172 = ssub.s32 %s23, %s30
      %p173 = scmp.eq.s32.totalorder %s172, 0
      %s175 = sadd.s32 %s174, 1
      %s176 = scalar_select %p173, %s174, %s175
      %p179 = pneg %p173
      %p180 = scmp.eq.s32.totalorder %s23, 1
      %p181 = por %p179, %p180
      %p182 = scmp.ne.s32.totalorder %s174, %s177
      %p183 = scmp.eq.s32.totalorder %s23, 0
      %p184 = por %p182, %p183
      %p185 = scmp.ne.s32.totalorder %s174, %s177
      %p186 = scmp.eq.s32.totalorder %s28, 1
      %p187 = por %p185, %p186
      %p188 = scmp.ne.s32.totalorder %s177, %s178
      %p189 = scmp.eq.s32.totalorder %s28, 0
      %p190 = por %p188, %p189
      %p191 = scmp.ne.s32.totalorder %s177, %s178
      %p192 = scmp.eq.s32.totalorder %s29, 1
      %p193 = por %p191, %p192
      %p195 = scmp.ne.s32.totalorder %s178, %s194
      %p196 = scmp.eq.s32.totalorder %s29, 0
      %p197 = por %p195, %p196
      %s198 = ssub.s32 %s23, %s30
      %p199 = scmp.eq.s32.totalorder %s198, 0
      %s201 = sadd.s32 %s200, 1
      %s202 = scalar_select %p199, %s200, %s201
      %p205 = pneg %p199
      %p206 = scmp.eq.s32.totalorder %s23, 1
      %p207 = por %p205, %p206
      %p208 = scmp.ne.s32.totalorder %s200, %s203
      %p209 = scmp.eq.s32.totalorder %s23, 0
      %p210 = por %p208, %p209
      %p211 = scmp.ne.s32.totalorder %s200, %s203
      %p212 = scmp.eq.s32.totalorder %s28, 1
      %p213 = por %p211, %p212
      %p214 = scmp.ne.s32.totalorder %s203, %s204
      %p215 = scmp.eq.s32.totalorder %s28, 0
      %p216 = por %p214, %p215
      %p217 = scmp.ne.s32.totalorder %s203, %s204
      %p218 = scmp.eq.s32.totalorder %s29, 1
      %p219 = por %p217, %p218
      %p221 = scmp.ne.s32.totalorder %s204, %s220
      %p222 = scmp.eq.s32.totalorder %s29, 0
      %p223 = por %p221, %p222
      %s224 = ssub.s32 %s23, %s30
      %p225 = scmp.eq.s32.totalorder %s224, 0
      %s227 = sadd.s32 %s226, 1
      %s228 = scalar_select %p225, %s226, %s227
      %p231 = pneg %p225
      %p232 = scmp.eq.s32.totalorder %s23, 1
      %p233 = por %p231, %p232
      %p234 = scmp.ne.s32.totalorder %s226, %s229
      %p235 = scmp.eq.s32.totalorder %s23, 0
      %p236 = por %p234, %p235
      %p237 = scmp.ne.s32.totalorder %s226, %s229
      %p238 = scmp.eq.s32.totalorder %s28, 1
      %p239 = por %p237, %p238
      %p240 = scmp.ne.s32.totalorder %s229, %s230
      %p241 = scmp.eq.s32.totalorder %s28, 0
      %p242 = por %p240, %p241
      %p243 = scmp.ne.s32.totalorder %s229, %s230
      %p244 = scmp.eq.s32.totalorder %s29, 1
      %p245 = por %p243, %p244
      %p247 = scmp.ne.s32.totalorder %s230, %s246
      %p248 = scmp.eq.s32.totalorder %s29, 0
      %p249 = por %p247, %p248
      %s251 = sadd.s32 %s250, 1
      %p254 = scmp.eq.s32.totalorder %s23, 1
      %p255 = scmp.ne.s32.totalorder %s250, %s252
      %p256 = scmp.eq.s32.totalorder %s23, 0
      %p257 = por %p255, %p256
      %p258 = scmp.ne.s32.totalorder %s250, %s252
      %p259 = scmp.eq.s32.totalorder %s28, 1
      %p260 = por %p258, %p259
      %p261 = scmp.ne.s32.totalorder %s252, %s253
      %p262 = scmp.eq.s32.totalorder %s28, 0
      %p263 = por %p261, %p262
      %p264 = scmp.ne.s32.totalorder %s252, %s253
      %p265 = scmp.eq.s32.totalorder %s29, 1
      %p266 = por %p264, %p265
      %p268 = scmp.ne.s32.totalorder %s253, %s267
      %p269 = scmp.eq.s32.totalorder %s29, 0
      %p270 = por %p268, %p269
      %s271 = ssub.s32 %s23, %s30
      %p272 = scmp.eq.s32.totalorder %s271, 0
      %s274 = sadd.s32 %s273, 1
      %s275 = scalar_select %p272, %s273, %s274
      %p278 = pneg %p272
      %p279 = scmp.eq.s32.totalorder %s23, 1
      %p280 = por %p278, %p279
      %p281 = scmp.ne.s32.totalorder %s273, %s276
      %p282 = scmp.eq.s32.totalorder %s23, 0
      %p283 = por %p281, %p282
      %p284 = scmp.ne.s32.totalorder %s273, %s276
      %p285 = scmp.eq.s32.totalorder %s28, 1
      %p286 = por %p284, %p285
      %p287 = scmp.ne.s32.totalorder %s276, %s277
      %p288 = scmp.eq.s32.totalorder %s28, 0
      %p289 = por %p287, %p288
      %p290 = scmp.ne.s32.totalorder %s276, %s277
      %p291 = scmp.eq.s32.totalorder %s29, 1
      %p292 = por %p290, %p291
      %p294 = scmp.ne.s32.totalorder %s277, %s293
      %p295 = scmp.eq.s32.totalorder %s29, 0
      %p296 = por %p294, %p295
      %p297 = scmp.le.s32.totalorder 1, %s23
      %p298 = scmp.lt.s32.totalorder %s23, 3
      %p299 = pnand %p297, %p298
      %p300 = pneg %p299
      // Predicated region
      $region9: #{tpu_custom_call.1} parent=5 // pred_check
        _
      $region10: #{tpu_custom_call.1} parent=5 // pred_check_branch
        %302 = sbr.rel (%p299) target = $region12
      $region11: #{tpu_custom_call.1} parent=5 // pred_region
        %s303 = ssub.s32 %s23, 1
        // Predicated region
        $region13: #{tpu_custom_call.1} parent=11 // pred_check
          %p304 = pneg %p44
        $region14: #{tpu_custom_call.1} parent=11 // pred_check_branch
          %306 = sbr.rel (%p304) target = $region16
        $region15: #{tpu_custom_call.1} parent=11 // pred_region
          %s308 = ssub.s32 128, 128
          %309 = vsyncadd [#allocation3], %s308
          %s310 = sshll.u32 [#allocation2], 4
          %s311 = int_to_ptr.vmem [resolvable:$true] %s310
          %316 = dma.hbm_to_vmem [thread:$0]  %s0, 128, %s311, [#allocation3], 64, 64, 4
        $region16: #{tpu_custom_call.1} parent=11 // pred_fallthru
          _
        // Predicated region
        $region17: #{tpu_custom_call.1} parent=11 // pred_check
          %p317 = pneg %p65
        $region18: #{tpu_custom_call.1} parent=11 // pred_check_branch
          %319 = sbr.rel (%p317) target = $region20
        $region19: #{tpu_custom_call.1} parent=11 // pred_region
          _
        $region20: #{tpu_custom_call.1} parent=11 // pred_fallthru
          _
        // Predicated region
        $region21: #{tpu_custom_call.1} parent=11 // pred_check
          %p320 = pneg %p86
        $region22: #{tpu_custom_call.1} parent=11 // pred_check_branch
          %322 = sbr.rel (%p320) target = $region24
        $region23: #{tpu_custom_call.1} parent=11 // pred_region
          %s324 = ssub.s32 256, 256
          %325 = vsyncadd [#allocation6], %s324
          %s326 = sshll.u32 [#allocation5], 4
          %s327 = int_to_ptr.vmem [resolvable:$true] %s326
          %332 = dma.hbm_to_vmem [thread:$0]  %s2, 256, %s327, [#allocation6], 128, 128, 8
        $region24: #{tpu_custom_call.1} parent=11 // pred_fallthru
          _
      $region12: #{tpu_custom_call.1} parent=5 // pred_fallthru
        _
      %p333 = scmp.lt.s32.totalorder %s23, 2
      // Predicated region
      $region25: #{tpu_custom_call.1} parent=5 // pred_check
        %p334 = pneg %p333
      $region26: #{tpu_custom_call.1} parent=5 // pred_check_branch
        %336 = sbr.rel (%p334) target = $region28
      $region27: #{tpu_custom_call.1} parent=5 // pred_region
        // Predicated region
        $region29: #{tpu_custom_call.1} parent=27 // pred_check
          %p337 = pneg %p106
        $region30: #{tpu_custom_call.1} parent=27 // pred_check_branch
          %339 = sbr.rel (%p337) target = $region32
        $region31: #{tpu_custom_call.1} parent=27 // pred_region
          %s340 = sand.u32 %s23, 1
          %s341 = scalar_lea.sflag [#allocation3], %s340
          %s342 = sand.u32 %s96, 1
          %s343 = smul.addr %s342, 64
          %s344 = scalar_lea.vmem [#allocation7], %s343
          %s346 = ssub.s32 1024, 1024
          %347 = vsyncadd %s341, %s346
          %s348 = smul.addr %s23, 16
          %s349 = smul.addr %s348, 64
          %s350 = scalar_lea.hbm %s3, %s349
          %s351 = sshll.u32 %s344, 4
          %s352 = int_to_ptr.vmem [resolvable:$true] %s351
          %357 = dma.hbm_to_vmem [thread:$0]  %s350, 1024, %s352, %s341, 64, 64, 4
        $region32: #{tpu_custom_call.1} parent=27 // pred_fallthru
          _
        // Predicated region
        $region33: #{tpu_custom_call.1} parent=27 // pred_check
          %p358 = pneg %p132
        $region34: #{tpu_custom_call.1} parent=27 // pred_check_branch
          %360 = sbr.rel (%p358) target = $region36
        $region35: #{tpu_custom_call.1} parent=27 // pred_region
          %s361 = sand.u32 %s23, 1
          %s362 = scalar_lea.sflag [#allocation3], %s361
          %s363 = sand.u32 %s122, 1
          %s364 = smul.addr %s363, 64
          %s365 = scalar_lea.vmem [#allocation8], %s364
          %s367 = ssub.s32 1024, 1024
          %368 = vsyncadd %s362, %s367
          %s369 = smul.addr %s23, 16
          %s370 = smul.addr %s369, 64
          %s371 = scalar_lea.hbm %s4, %s370
          %s372 = sshll.u32 %s365, 4
          %s373 = int_to_ptr.vmem [resolvable:$true] %s372
          %378 = dma.hbm_to_vmem [thread:$0]  %s371, 1024, %s373, %s362, 64, 64, 4
        $region36: #{tpu_custom_call.1} parent=27 // pred_fallthru
          _
        // Predicated region
        $region37: #{tpu_custom_call.1} parent=27 // pred_check
          %p379 = pneg %p158
        $region38: #{tpu_custom_call.1} parent=27 // pred_check_branch
          %381 = sbr.rel (%p379) target = $region40
        $region39: #{tpu_custom_call.1} parent=27 // pred_region
          %p382 = scmp.lt.s32.totalorder %s23, 1
          %s383 = scalar_select %p382, %s23, 1
          %s384 = scalar_lea.vmem %s5, %s383
        $region40: #{tpu_custom_call.1} parent=27 // pred_fallthru
          _
        // Predicated region
        $region41: #{tpu_custom_call.1} parent=27 // pred_check
          %p385 = pneg %p184
        $region42: #{tpu_custom_call.1} parent=27 // pred_check_branch
          %387 = sbr.rel (%p385) target = $region44
        $region43: #{tpu_custom_call.1} parent=27 // pred_region
          %p388 = scmp.lt.s32.totalorder %s23, 1
          %s389 = scalar_select %p388, %s23, 1
          %s390 = scalar_lea.vmem %s6, %s389
        $region44: #{tpu_custom_call.1} parent=27 // pred_fallthru
          _
        // Predicated region
        $region45: #{tpu_custom_call.1} parent=27 // pred_check
          %p391 = pneg %p210
        $region46: #{tpu_custom_call.1} parent=27 // pred_check_branch
          %393 = sbr.rel (%p391) target = $region48
        $region47: #{tpu_custom_call.1} parent=27 // pred_region
          %p394 = scmp.lt.s32.totalorder %s23, 1
          %s395 = scalar_select %p394, %s23, 1
          %s396 = scalar_lea.vmem %s7, %s395
        $region48: #{tpu_custom_call.1} parent=27 // pred_fallthru
          _
        // Predicated region
        $region49: #{tpu_custom_call.1} parent=27 // pred_check
          %p397 = pneg %p236
        $region50: #{tpu_custom_call.1} parent=27 // pred_check_branch
          %399 = sbr.rel (%p397) target = $region52
        $region51: #{tpu_custom_call.1} parent=27 // pred_region
          %p400 = scmp.lt.s32.totalorder %s23, 1
          %s401 = scalar_select %p400, %s23, 1
          %s402 = scalar_lea.vmem %s8, %s401
        $region52: #{tpu_custom_call.1} parent=27 // pred_fallthru
          _
      $region28: #{tpu_custom_call.1} parent=5 // pred_fallthru
        _
      %p403 = scmp.le.s32.totalorder 1, %s23
      %p404 = scmp.lt.s32.totalorder %s23, 3
      %p405 = pnand %p403, %p404
      %p406 = pneg %p405
      // Predicated region
      $region53: #{tpu_custom_call.1} parent=5 // pred_check
        _
      $region54: #{tpu_custom_call.1} parent=5 // pred_check_branch
        %408 = sbr.rel (%p405) target = $region56
      $region55: #{tpu_custom_call.1} parent=5 // pred_region
        %s409 = ssub.s32 %s23, 1
        // Predicated region
        $region57: #{tpu_custom_call.1} parent=55 // pred_check
          %p410 = pneg %p44
        $region58: #{tpu_custom_call.1} parent=55 // pred_check_branch
          %412 = sbr.rel (%p410) target = $region60
        $region59: #{tpu_custom_call.1} parent=55 // pred_region
          %413 = dma.done [#allocation3], 128
        $region60: #{tpu_custom_call.1} parent=55 // pred_fallthru
          _
        // Predicated region
        $region61: #{tpu_custom_call.1} parent=55 // pred_check
          %p414 = pneg %p86
        $region62: #{tpu_custom_call.1} parent=55 // pred_check_branch
          %416 = sbr.rel (%p414) target = $region64
        $region63: #{tpu_custom_call.1} parent=55 // pred_region
          %417 = dma.done [#allocation6], 256
        $region64: #{tpu_custom_call.1} parent=55 // pred_fallthru
          _
        %s418 = sand.u32 %s28, 1
        %s419 = scalar_lea.sflag [#allocation3], %s418
        %s420 = sand.u32 %s99, 1
        %s421 = smul.addr %s420, 64
        %s422 = scalar_lea.vmem [#allocation7], %s421
        // Predicated region
        $region65: #{tpu_custom_call.1} parent=55 // pred_check
          %p423 = pneg %p112
        $region66: #{tpu_custom_call.1} parent=55 // pred_check_branch
          %425 = sbr.rel (%p423) target = $region68
        $region67: #{tpu_custom_call.1} parent=55 // pred_region
          %426 = dma.done %s419, 1024
        $region68: #{tpu_custom_call.1} parent=55 // pred_fallthru
          _
        %s427 = sand.u32 %s28, 1
        %s428 = scalar_lea.sflag [#allocation3], %s427
        %s429 = sand.u32 %s125, 1
        %s430 = smul.addr %s429, 64
        %s431 = scalar_lea.vmem [#allocation8], %s430
        // Predicated region
        $region69: #{tpu_custom_call.1} parent=55 // pred_check
          %p432 = pneg %p138
        $region70: #{tpu_custom_call.1} parent=55 // pred_check_branch
          %434 = sbr.rel (%p432) target = $region72
        $region71: #{tpu_custom_call.1} parent=55 // pred_region
          %435 = dma.done %s428, 1024
        $region72: #{tpu_custom_call.1} parent=55 // pred_fallthru
          _
        %p436 = pneg %p44
        %p437 = pneg %p41
        %p438 = pneg %p65
        %p439 = pneg %p62
        %p440 = pneg %p86
        %p441 = pneg %p83
        %s442 = sand.u32 %s28, 1
        %s443 = scalar_lea.sflag [#allocation3], %s442
        %s444 = sand.u32 %s99, 1
        %s445 = smul.addr %s444, 64
        %s446 = scalar_lea.vmem [#allocation7], %s445
        %p447 = pneg %p112
        %p448 = pneg %p109
        %s449 = sand.u32 %s28, 1
        %s450 = scalar_lea.sflag [#allocation3], %s449
        %s451 = sand.u32 %s125, 1
        %s452 = smul.addr %s451, 64
        %s453 = scalar_lea.vmem [#allocation8], %s452
        %p454 = pneg %p138
        %p455 = pneg %p135
        %p456 = scmp.lt.s32.totalorder %s28, 1
        %s457 = scalar_select %p456, %s28, 1
        %s458 = scalar_lea.vmem %s5, %s457
        %p459 = pneg %p164
        %p460 = pneg %p161
        %p461 = scmp.lt.s32.totalorder %s28, 1
        %s462 = scalar_select %p461, %s28, 1
        %s463 = scalar_lea.vmem %s6, %s462
        %p464 = pneg %p190
        %p465 = pneg %p187
        %p466 = scmp.lt.s32.totalorder %s28, 1
        %s467 = scalar_select %p466, %s28, 1
        %s468 = scalar_lea.vmem %s7, %s467
        %p469 = pneg %p216
        %p470 = pneg %p213
        %p471 = scmp.lt.s32.totalorder %s28, 1
        %s472 = scalar_select %p471, %s28, 1
        %s473 = scalar_lea.vmem %s8, %s472
        %p474 = pneg %p242
        %p475 = pneg %p239
        %p476 = pneg %p263
        %p477 = pneg %p260
        %p478 = pneg %p289
        %p479 = pneg %p286
        %s480 = sand.u32 %s276, 1
        %s481 = scalar_lea.sflag [#allocation11], %s480
        %s482 = sand.u32 %s276, 1
        %s483 = smul.addr %s482, 2
        %s484 = scalar_lea.vmem [#allocation10], %s483
        %p485 = scmp.lt.s32.totalorder %s28, 1
        %s486 = scalar_select %p485, %s28, 1
        %s487 = scalar_lea.vmem %s5, %s486
        %p488 = scmp.lt.s32.totalorder %s28, 1
        %s489 = scalar_select %p488, %s28, 1
        %s490 = scalar_lea.vmem %s6, %s489
        %p491 = scmp.lt.s32.totalorder %s28, 1
        %s492 = scalar_select %p491, %s28, 1
        %s493 = scalar_lea.vmem %s7, %s492
        %p494 = scmp.lt.s32.totalorder %s28, 1
        %s495 = scalar_select %p494, %s28, 1
        %s496 = scalar_lea.vmem %s8, %s495
        %p498 = scmp.eq.s32.totalorder %s28, 0
        // Predicated region
        $region73: #{tpu_custom_call.1} parent=55 // pred_check
          %p499 = pneg %p498
        $region74: #{tpu_custom_call.1} parent=55 // pred_check_branch
          %501 = sbr.rel (%p499) target = $region76
        $region75: #{tpu_custom_call.1} parent=55 // pred_region
          %v502 = vld [vmem:[#allocation5] sm:$0xff]
          %v503 = vld [vmem:[#allocation5 + $0x8] sm:$0xff]
          %504 = vst [vmem:[#allocation9] sm:$0xff] %v502
          %505 = vst [vmem:[#allocation9 + $0x8] sm:$0xff] %v503
        $region76: #{tpu_custom_call.1} parent=55 // pred_fallthru
          _
        %v506 = vld [vmem:[#allocation9] sm:$0xff]
        %v507 = vld [vmem:[#allocation9 + $0x8] sm:$0xff]
        %v508 = vld [vmem:[#allocation2] sm:$0xf]
        %v509 = vld [vmem:[#allocation2 + $0x4] sm:$0xf]
        %v510 = vpack.c.bf16 %v507, %v506
        %v513 = vunpack.c.l.b16 %v508
        %v514 = vunpack.c.l.b16 %v509
        %v515 = vpack.c.b16 %v514, %v513
        %vm516 = vcmask 130048
        %v518 = vsel %vm516, %v515, 0
        %520 = vmatprep.subr.bf16.mxu0 0
        %521 = vmatpush1.bf16.msra.mxu0 0
        %522 = vmatprep.subr.bf16.mxu0 0
        %523 = vmatpush1.bf16.msra.mxu0 0
        %524 = vmatprep.subr.bf16.mxu0 0
        %525 = vmatpush1.bf16.msra.mxu0 0
        %526 = vmatprep.subr.bf16.mxu0 0
        %527 = vmatpush1.bf16.msra.mxu0 0
        %528 = vmatprep.subr.bf16.mxu0 0
        %529 = vmatpush1.bf16.msra.mxu0 0
        %530 = vmatprep.subr.bf16.mxu0 0
        %531 = vmatpush1.bf16.msra.mxu0 0
        %532 = vmatprep.subr.bf16.mxu0 0
        %533 = vmatpush1.bf16.msra.mxu0 0
        %534 = vmatprep.subr.bf16.mxu0 0
        %535 = vmatpush1.bf16.msra.mxu0 %v510
        %536 = vmatprep.subr.bf16.mxu0 0
        %537 = vmatpush2.bf16.msra.mxu0 0
        %538 = vmatprep.subr.bf16.mxu0 0
        %539 = vmatpush2.bf16.msra.mxu0 0
        %540 = vmatprep.subr.bf16.mxu0 0
        %541 = vmatpush2.bf16.msra.mxu0 0
        %542 = vmatprep.subr.bf16.mxu0 0
        %543 = vmatpush2.bf16.msra.mxu0 0
        %544 = vmatprep.subr.bf16.mxu0 0
        %545 = vmatpush2.bf16.msra.mxu0 0
        %546 = vmatprep.subr.bf16.mxu0 0
        %547 = vmatpush2.bf16.msra.mxu0 0
        %548 = vmatprep.subr.bf16.mxu0 0
        %549 = vmatpush2.bf16.msra.mxu0 0
        %550 = vmatprep.subr.bf16.mxu0 0
        %551 = vmatpush2.bf16.msra.mxu0 0
        %552 = vmatprep.mubr.bf16.mxu0 0
        %553 = vmatmul.mubr.bf16.gmra.mxu0 %v518
        %v554 = vpop.f32.mrf.mxu0
        %v555 = vadd.f32 0.0, %v554
        %v556 = vpop.f32.mrf.mxu0
        %v557 = vpop.f32.mrf.mxu0
        %v558 = vadd.f32 0.0, %v557
        %v559 = vpop.f32.mrf.mxu0
        %560 = vdwg.mxu0
        %v561 = vadd.f32 %v506, %v555
        %v562 = vadd.f32 %v507, %v558
        %v563 = vpack.c.bf16 %v562, %v561
        %v564 = vld [vmem:[%s422] sm:$0xf]
        %v565 = vld [vmem:[%s422 + $0x4] sm:$0xf]
        %v566 = vld [vmem:[%s422 + $0x8] sm:$0xf]
        %v567 = vld [vmem:[%s422 + $0xc] sm:$0xf]
        %v568 = vld [vmem:[%s422 + $0x10] sm:$0xf]
        %v569 = vld [vmem:[%s422 + $0x14] sm:$0xf]
        %v570 = vld [vmem:[%s422 + $0x18] sm:$0xf]
        %v571 = vld [vmem:[%s422 + $0x1c] sm:$0xf]
        %v572 = vld [vmem:[%s422 + $0x20] sm:$0xf]
        %v573 = vld [vmem:[%s422 + $0x24] sm:$0xf]
        %v574 = vld [vmem:[%s422 + $0x28] sm:$0xf]
        %v575 = vld [vmem:[%s422 + $0x2c] sm:$0xf]
        %v576 = vld [vmem:[%s422 + $0x30] sm:$0xf]
        %v577 = vld [vmem:[%s422 + $0x34] sm:$0xf]
        %v578 = vld [vmem:[%s422 + $0x38] sm:$0xf]
        %v579 = vld [vmem:[%s422 + $0x3c] sm:$0xf]
        %v596 = vunpack.c.l.b16 %v564
        %v597 = vunpack.c.l.b16 %v565
        %v598 = vunpack.c.l.b16 %v566
        %v599 = vunpack.c.l.b16 %v567
        %v600 = vunpack.c.l.b16 %v568
        %v601 = vunpack.c.l.b16 %v569
        %v602 = vunpack.c.l.b16 %v570
        %v603 = vunpack.c.l.b16 %v571
        %v604 = vunpack.c.l.b16 %v572
        %v605 = vunpack.c.l.b16 %v573
        %v606 = vunpack.c.l.b16 %v574
        %v607 = vunpack.c.l.b16 %v575
        %v608 = vunpack.c.l.b16 %v576
        %v609 = vunpack.c.l.b16 %v577
        %v610 = vunpack.c.l.b16 %v578
        %v611 = vunpack.c.l.b16 %v579
        %v612 = vpack.c.b16 %v597, %v596
        %v613 = vpack.c.b16 %v599, %v598
        %v614 = vpack.c.b16 %v601, %v600
        %v615 = vpack.c.b16 %v603, %v602
        %v616 = vpack.c.b16 %v605, %v604
        %v617 = vpack.c.b16 %v607, %v606
        %v618 = vpack.c.b16 %v609, %v608
        %v619 = vpack.c.b16 %v611, %v610
        %628 = vmatprep.subr.bf16.mxu0 0
        %629 = vmatpush1.bf16.msra.mxu0 %v619
        %630 = vmatprep.subr.bf16.mxu0 0
        %631 = vmatpush1.bf16.msra.mxu0 %v618
        %632 = vmatprep.subr.bf16.mxu0 0
        %633 = vmatpush1.bf16.msra.mxu0 %v617
        %634 = vmatprep.subr.bf16.mxu0 0
        %635 = vmatpush1.bf16.msra.mxu0 %v616
        %636 = vmatprep.subr.bf16.mxu0 0
        %637 = vmatpush1.bf16.msra.mxu0 %v615
        %638 = vmatprep.subr.bf16.mxu0 0
        %639 = vmatpush1.bf16.msra.mxu0 %v614
        %640 = vmatprep.subr.bf16.mxu0 0
        %641 = vmatpush1.bf16.msra.mxu0 %v613
        %642 = vmatprep.subr.bf16.mxu0 0
        %643 = vmatpush1.bf16.msra.mxu0 %v612
        %644 = vmatprep.subr.bf16.mxu0 0
        %645 = vmatpush2.bf16.msra.mxu0 0
        %646 = vmatprep.subr.bf16.mxu0 0
        %647 = vmatpush2.bf16.msra.mxu0 0
        %648 = vmatprep.subr.bf16.mxu0 0
        %649 = vmatpush2.bf16.msra.mxu0 0
        %650 = vmatprep.subr.bf16.mxu0 0
        %651 = vmatpush2.bf16.msra.mxu0 0
        %652 = vmatprep.subr.bf16.mxu0 0
        %653 = vmatpush2.bf16.msra.mxu0 0
        %654 = vmatprep.subr.bf16.mxu0 0
        %655 = vmatpush2.bf16.msra.mxu0 0
        %656 = vmatprep.subr.bf16.mxu0 0
        %657 = vmatpush2.bf16.msra.mxu0 0
        %658 = vmatprep.subr.bf16.mxu0 0
        %659 = vmatpush2.bf16.msra.mxu0 0
        %660 = vmatprep.mubr.bf16.mxu0 0
        %661 = vmatmul.mubr.bf16.gmra.mxu0 %v563
        %v662 = vpop.f32.mrf.mxu0
        %v663 = vadd.f32 0.0, %v662
        %v664 = vpop.f32.mrf.mxu0
        %v665 = vpop.f32.mrf.mxu0
        %v666 = vadd.f32 0.0, %v665
        %v667 = vpop.f32.mrf.mxu0
        %668 = vdwg.mxu0
        %v669 = vadd.f32 %v663, %v666
        %v670 = vrot.slane %v669, 4
        %v671 = vadd.f32 %v669, %v670
        %v672 = vrot.slane %v671, 2
        %v673 = vadd.f32 %v671, %v672
        %v674 = vrot.slane %v673, 1
        %v675 = vadd.f32 %v673, %v674
        %v676 = vmul.f32 %v675, 0.0625
        %v677 = vsub.f32 %v663, %v676
        %v678 = vsub.f32 %v666, %v676
        %v679 = vmul.f32 %v677, %v677
        %v680 = vmul.f32 %v678, %v678
        %v681 = vadd.f32 %v679, %v680
        %v682 = vrot.slane %v681, 4
        %v683 = vadd.f32 %v681, %v682
        %v684 = vrot.slane %v683, 2
        %v685 = vadd.f32 %v683, %v684
        %v686 = vrot.slane %v685, 1
        %v687 = vadd.f32 %v685, %v686
        %v688 = vmul.f32 %v687, 0.0625
        %v689 = vadd.f32 %v688, 1e-05
        %v690 = vrsqrt.pop %v689
        %v691 = vmul.f32 %v677, %v690
        %v692 = vmul.f32 %v678, %v690
        %v693 = vld [vmem:[%s487] sm:$0x1]
        %v695 = vlaneseq
        %v696 = vshrl.u32 %v695, 7
        %v697 = vsub.s32 0, %v696
        %v698 = vrot.slane %v693, %v697
        %v700 = vmul.f32 %v691, %v698
        %v701 = vmul.f32 %v692, %v698
        %v702 = vld [vmem:[%s490] sm:$0x1]
        %v704 = vlaneseq
        %v705 = vshrl.u32 %v704, 7
        %v706 = vsub.s32 0, %v705
        %v707 = vrot.slane %v702, %v706
        %v709 = vadd.f32 %v700, %v707
        %v710 = vadd.f32 %v701, %v707
        %v711 = vmax.f32 %v709, 0.0
        %v712 = vmax.f32 %v710, 0.0
        %v713 = vpack.c.bf16 %v712, %v711
        %v714 = vld [vmem:[%s431] sm:$0xf]
        %v715 = vld [vmem:[%s431 + $0x4] sm:$0xf]
        %v716 = vld [vmem:[%s431 + $0x8] sm:$0xf]
        %v717 = vld [vmem:[%s431 + $0xc] sm:$0xf]
        %v718 = vld [vmem:[%s431 + $0x10] sm:$0xf]
        %v719 = vld [vmem:[%s431 + $0x14] sm:$0xf]
        %v720 = vld [vmem:[%s431 + $0x18] sm:$0xf]
        %v721 = vld [vmem:[%s431 + $0x1c] sm:$0xf]
        %v722 = vld [vmem:[%s431 + $0x20] sm:$0xf]
        %v723 = vld [vmem:[%s431 + $0x24] sm:$0xf]
        %v724 = vld [vmem:[%s431 + $0x28] sm:$0xf]
        %v725 = vld [vmem:[%s431 + $0x2c] sm:$0xf]
        %v726 = vld [vmem:[%s431 + $0x30] sm:$0xf]
        %v727 = vld [vmem:[%s431 + $0x34] sm:$0xf]
        %v728 = vld [vmem:[%s431 + $0x38] sm:$0xf]
        %v729 = vld [vmem:[%s431 + $0x3c] sm:$0xf]
        %v746 = vunpack.c.l.b16 %v714
        %v747 = vunpack.c.l.b16 %v715
        %v748 = vunpack.c.l.b16 %v716
        %v749 = vunpack.c.l.b16 %v717
        %v750 = vunpack.c.l.b16 %v718
        %v751 = vunpack.c.l.b16 %v719
        %v752 = vunpack.c.l.b16 %v720
        %v753 = vunpack.c.l.b16 %v721
        %v754 = vunpack.c.l.b16 %v722
        %v755 = vunpack.c.l.b16 %v723
        %v756 = vunpack.c.l.b16 %v724
        %v757 = vunpack.c.l.b16 %v725
        %v758 = vunpack.c.l.b16 %v726
        %v759 = vunpack.c.l.b16 %v727
        %v760 = vunpack.c.l.b16 %v728
        %v761 = vunpack.c.l.b16 %v729
        %v762 = vpack.c.b16 %v747, %v746
        %v763 = vpack.c.b16 %v749, %v748
        %v764 = vpack.c.b16 %v751, %v750
        %v765 = vpack.c.b16 %v753, %v752
        %v766 = vpack.c.b16 %v755, %v754
        %v767 = vpack.c.b16 %v757, %v756
        %v768 = vpack.c.b16 %v759, %v758
        %v769 = vpack.c.b16 %v761, %v760
        %778 = vmatprep.subr.bf16.mxu0 0
        %779 = vmatpush1.bf16.msra.mxu0 %v769
        %780 = vmatprep.subr.bf16.mxu0 0
        %781 = vmatpush1.bf16.msra.mxu0 %v768
        %782 = vmatprep.subr.bf16.mxu0 0
        %783 = vmatpush1.bf16.msra.mxu0 %v767
        %784 = vmatprep.subr.bf16.mxu0 0
        %785 = vmatpush1.bf16.msra.mxu0 %v766
        %786 = vmatprep.subr.bf16.mxu0 0
        %787 = vmatpush1.bf16.msra.mxu0 %v765
        %788 = vmatprep.subr.bf16.mxu0 0
        %789 = vmatpush1.bf16.msra.mxu0 %v764
        %790 = vmatprep.subr.bf16.mxu0 0
        %791 = vmatpush1.bf16.msra.mxu0 %v763
        %792 = vmatprep.subr.bf16.mxu0 0
        %793 = vmatpush1.bf16.msra.mxu0 %v762
        %794 = vmatprep.subr.bf16.mxu0 0
        %795 = vmatpush2.bf16.msra.mxu0 0
        %796 = vmatprep.subr.bf16.mxu0 0
        %797 = vmatpush2.bf16.msra.mxu0 0
        %798 = vmatprep.subr.bf16.mxu0 0
        %799 = vmatpush2.bf16.msra.mxu0 0
        %800 = vmatprep.subr.bf16.mxu0 0
        %801 = vmatpush2.bf16.msra.mxu0 0
        %802 = vmatprep.subr.bf16.mxu0 0
        %803 = vmatpush2.bf16.msra.mxu0 0
        %804 = vmatprep.subr.bf16.mxu0 0
        %805 = vmatpush2.bf16.msra.mxu0 0
        %806 = vmatprep.subr.bf16.mxu0 0
        %807 = vmatpush2.bf16.msra.mxu0 0
        %808 = vmatprep.subr.bf16.mxu0 0
        %809 = vmatpush2.bf16.msra.mxu0 0
        %810 = vmatprep.mubr.bf16.mxu0 0
        %811 = vmatmul.mubr.bf16.gmra.mxu0 %v713
        %v812 = vpop.f32.mrf.mxu0
        %v813 = vadd.f32 0.0, %v812
        %v814 = vpop.f32.mrf.mxu0
        %v815 = vpop.f32.mrf.mxu0
        %v816 = vadd.f32 0.0, %v815
        %v817 = vpop.f32.mrf.mxu0
        %818 = vdwg.mxu0
        %v819 = vadd.f32 %v813, %v816
        %v820 = vrot.slane %v819, 4
        %v821 = vadd.f32 %v819, %v820
        %v822 = vrot.slane %v821, 2
        %v823 = vadd.f32 %v821, %v822
        %v824 = vrot.slane %v823, 1
        %v825 = vadd.f32 %v823, %v824
        %v826 = vmul.f32 %v825, 0.0625
        %v827 = vsub.f32 %v813, %v826
        %v828 = vsub.f32 %v816, %v826
        %v829 = vmul.f32 %v827, %v827
        %v830 = vmul.f32 %v828, %v828
        %v831 = vadd.f32 %v829, %v830
        %v832 = vrot.slane %v831, 4
        %v833 = vadd.f32 %v831, %v832
        %v834 = vrot.slane %v833, 2
        %v835 = vadd.f32 %v833, %v834
        %v836 = vrot.slane %v835, 1
        %v837 = vadd.f32 %v835, %v836
        %v838 = vmul.f32 %v837, 0.0625
        %v839 = vadd.f32 %v838, 1e-05
        %v840 = vrsqrt.pop %v839
        %v841 = vmul.f32 %v827, %v840
        %v842 = vmul.f32 %v828, %v840
        %v843 = vld [vmem:[%s493] sm:$0x1]
        %v845 = vlaneseq
        %v846 = vshrl.u32 %v845, 7
        %v847 = vsub.s32 0, %v846
        %v848 = vrot.slane %v843, %v847
        %v850 = vmul.f32 %v841, %v848
        %v851 = vmul.f32 %v842, %v848
        %v852 = vld [vmem:[%s496] sm:$0x1]
        %v854 = vlaneseq
        %v855 = vshrl.u32 %v854, 7
        %v856 = vsub.s32 0, %v855
        %v857 = vrot.slane %v852, %v856
        %v859 = vadd.f32 %v850, %v857
        %v860 = vadd.f32 %v851, %v857
        %v861 = vmax.f32 %v859, 0.0
        %v862 = vmax.f32 %v860, 0.0
        %863 = vst [vmem:[#allocation9] sm:$0xff] %v861
        %864 = vst [vmem:[#allocation9 + $0x8] sm:$0xff] %v862
        %v865 = vld [vmem:[%s1] sm:$0x1]
        %v866 = vpack.c.bf16 %v862, %v861
        %v868 = vsel %vm516, %v865, 0
        %870 = vmatprep.subr.bf16.mxu0 0
        %871 = vmatpush1.bf16.msra.mxu0 0
        %872 = vmatprep.subr.bf16.mxu0 0
        %873 = vmatpush1.bf16.msra.mxu0 0
        %874 = vmatprep.subr.bf16.mxu0 0
        %875 = vmatpush1.bf16.msra.mxu0 0
        %876 = vmatprep.subr.bf16.mxu0 0
        %877 = vmatpush1.bf16.msra.mxu0 0
        %878 = vmatprep.subr.bf16.mxu0 0
        %879 = vmatpush1.bf16.msra.mxu0 0
        %880 = vmatprep.subr.bf16.mxu0 0
        %881 = vmatpush1.bf16.msra.mxu0 0
        %882 = vmatprep.subr.bf16.mxu0 0
        %883 = vmatpush1.bf16.msra.mxu0 0
        %884 = vmatprep.subr.bf16.mxu0 0
        %885 = vmatpush1.bf16.msra.mxu0 %v866
        %886 = vmatprep.subr.bf16.mxu0 0
        %887 = vmatpush2.bf16.msra.mxu0 0
        %888 = vmatprep.subr.bf16.mxu0 0
        %889 = vmatpush2.bf16.msra.mxu0 0
        %890 = vmatprep.subr.bf16.mxu0 0
        %891 = vmatpush2.bf16.msra.mxu0 0
        %892 = vmatprep.subr.bf16.mxu0 0
        %893 = vmatpush2.bf16.msra.mxu0 0
        %894 = vmatprep.subr.bf16.mxu0 0
        %895 = vmatpush2.bf16.msra.mxu0 0
        %896 = vmatprep.subr.bf16.mxu0 0
        %897 = vmatpush2.bf16.msra.mxu0 0
        %898 = vmatprep.subr.bf16.mxu0 0
        %899 = vmatpush2.bf16.msra.mxu0 0
        %900 = vmatprep.subr.bf16.mxu0 0
        %901 = vmatpush2.bf16.msra.mxu0 0
        %902 = vmatprep.mubr.bf16.mxu0 0
        %903 = vmatmul.mubr.bf16.gmra.mxu0 %v868
        %v904 = vpop.f32.mrf.mxu0
        %v905 = vadd.f32 0.0, %v904
        %v906 = vpop.f32.mrf.mxu0
        %v907 = vpop.f32.mrf.mxu0
        %v908 = vpop.f32.mrf.mxu0
        %909 = vdwg.mxu0
        %910 = vst [vmem:[%s484] sm:$0x3] %v905
        %s911 = sand.u32 %s276, 1
        %s912 = scalar_lea.sflag [#allocation11], %s911
        %s913 = sand.u32 %s276, 1
        %s914 = smul.addr %s913, 2
        %s915 = scalar_lea.vmem [#allocation10], %s914
        // Predicated region
        $region77: #{tpu_custom_call.1} parent=55 // pred_check
          %p916 = pneg %p260
        $region78: #{tpu_custom_call.1} parent=55 // pred_check_branch
          %918 = sbr.rel (%p916) target = $region80
        $region79: #{tpu_custom_call.1} parent=55 // pred_region
          %s920 = ssub.s32 256, 256
          %921 = vsyncadd [#allocation4], %s920
          %s922 = sshll.u32 [#allocation9], 4
          %s923 = int_to_ptr.vmem [resolvable:$true] %s922
          %928 = dma.vmem_to_hbm [thread:$0]  %s923, 256, %s9, [#allocation4], 128, 128, 8
        $region80: #{tpu_custom_call.1} parent=55 // pred_fallthru
          _
        // Predicated region
        $region81: #{tpu_custom_call.1} parent=55 // pred_check
          %p929 = pneg %p286
        $region82: #{tpu_custom_call.1} parent=55 // pred_check_branch
          %931 = sbr.rel (%p929) target = $region84
        $region83: #{tpu_custom_call.1} parent=55 // pred_region
          %s933 = ssub.s32 32, 32
          %934 = vsyncadd %s912, %s933
          %s935 = smul.addr %s28, 32
          %s936 = scalar_lea.hbm %s10, %s935
          %s938 = sshll.u32 %s915, 4
          %s939 = int_to_ptr.vmem [resolvable:$true] %s938
          %941 = dma.vmem_to_hbm [thread:$0]  %s939, 32, %s936, %s912
        $region84: #{tpu_custom_call.1} parent=55 // pred_fallthru
          _
        // Predicated region
        $region85: #{tpu_custom_call.1} parent=55 // pred_check
          %p942 = pneg %p260
        $region86: #{tpu_custom_call.1} parent=55 // pred_check_branch
          %944 = sbr.rel (%p942) target = $region88
        $region87: #{tpu_custom_call.1} parent=55 // pred_region
          %945 = dma.done [#allocation4], 256
        $region88: #{tpu_custom_call.1} parent=55 // pred_fallthru
          _
      $region56: #{tpu_custom_call.1} parent=5 // pred_fallthru
        _
      %p946 = scmp.le.s32.totalorder 2, %s23
      // Predicated region
      $region89: #{tpu_custom_call.1} parent=5 // pred_check
        %p947 = pneg %p946
      $region90: #{tpu_custom_call.1} parent=5 // pred_check_branch
        %949 = sbr.rel (%p947) target = $region92
      $region91: #{tpu_custom_call.1} parent=5 // pred_region
        %s950 = ssub.s32 %s23, 2
        // Predicated region
        $region93: #{tpu_custom_call.1} parent=91 // pred_check
          %p951 = pneg %p292
        $region94: #{tpu_custom_call.1} parent=91 // pred_check_branch
          %953 = sbr.rel (%p951) target = $region96
        $region95: #{tpu_custom_call.1} parent=91 // pred_region
          %s954 = sand.u32 %s277, 1
          %s955 = scalar_lea.sflag [#allocation11], %s954
          %s956 = sand.u32 %s277, 1
          %s957 = smul.addr %s956, 2
          %s958 = scalar_lea.vmem [#allocation10], %s957
          %959 = dma.done %s955, 32
        $region96: #{tpu_custom_call.1} parent=91 // pred_fallthru
          _
      $region92: #{tpu_custom_call.1} parent=5 // pred_fallthru
        _
    $region6: #{tpu_custom_call.1} parent=1 // loop_footer
      %s27 = sadd.s32 1, %s23
    $region7: #{tpu_custom_call.1} parent=1 // loop_footer_branch
      %22 = sbr.rel target = $region3
    $region8: #{tpu_custom_call.1} parent=1 // loop_exit
      _
    %960 = vsyncpa [#allocation3], 1
    %s961 = scalar_lea.sflag [#allocation3], 1
    %962 = vsyncpa %s961, 1
    %963 = vsyncpa [#allocation6], 1
    %964 = vsyncpa [#allocation4], 1
    %s965 = scalar_lea.sflag [#allocation4], 1
    %966 = vsyncpa %s965, 1
    %967 = vsyncpa [#allocation11], 1
    %s968 = scalar_lea.sflag [#allocation11], 1
    %969 = vsyncpa %s968, 1

// kernel: tpu_custom_call.1
$region0: #{tpu_custom_call.1}
  #allocation0 [shape = 'u32[]', space=smem, size = 0x4, offset = 0x4, fixed_abs, tag = 'smem constant byte address 0x4 - core index']
  #allocation1 [shape = 'u32[144,128]{1,0:T(1,128)}', space=vmem, size = 0x12000, scoped, tag = 'internal scratch']
  %s0 = inlined_call_operand.hbm [shape: bf16[16,16], index: 0, kind: input, shape index: {}]
  %s1 = inlined_call_operand.vmem [shape: bf16[2,16], index: 1, kind: input, shape index: {}]
  %s2 = inlined_call_operand.hbm [shape: f32[16,128], index: 2, kind: input, shape index: {}]
  %s3 = inlined_call_operand.hbm [shape: bf16[2,128,128], index: 3, kind: input, shape index: {}]
  %s4 = inlined_call_operand.hbm [shape: bf16[2,128,128], index: 4, kind: input, shape index: {}]
  %s5 = inlined_call_operand.vmem [shape: f32[2,1,128], index: 5, kind: input, shape index: {}]
  %s6 = inlined_call_operand.vmem [shape: f32[2,1,128], index: 6, kind: input, shape index: {}]
  %s7 = inlined_call_operand.vmem [shape: f32[2,1,128], index: 7, kind: input, shape index: {}]
  %s8 = inlined_call_operand.vmem [shape: f32[2,1,128], index: 8, kind: input, shape index: {}]
  %s9 = inlined_call_operand.hbm [shape: f32[16,128], index: 9, kind: output, shape index: {0}]
  %s10 = inlined_call_operand.hbm [shape: f32[2,256], index: 10, kind: output, shape index: {1}]
  %11 = xla_tuple %s9, %s10
  %s12 = sld [smem:[#allocation0]]
  $region97: #{tpu_custom_call.1} parent=0
    _
  %s14 = ssub.s32 1, %s12
  %s15 = scalar_select 0, %s14, %s12
  $region1: #{tpu_custom_call.1} parent=0
    #allocation2 [shape = 'u8[4096]{0}', space=vmem, size = 0x1000, scoped, tag = 'input window, operand 0, single buffered']
    #allocation3 [shape = 's32[2]{0}', space=sflag, size = 0x8, scoped, tag = 'scoped memory for tpu_custom_call.1']
    #allocation4 [shape = 's32[2]{0}', space=sflag, size = 0x8, scoped, tag = 'scoped memory for tpu_custom_call.1']
    #allocation5 [shape = 'u8[8192]{0}', space=vmem, size = 0x2000, scoped, tag = 'input window, operand 2, single buffered']
    #allocation6 [shape = 's32[1]{0}', space=sflag, size = 0x4, scoped, tag = 'scoped memory for tpu_custom_call.1']
    #allocation7 [shape = 'u8[65536]{0}', space=vmem, size = 0x10000, scoped, tag = 'input window, operand 3']
    #allocation8 [shape = 'u8[65536]{0}', space=vmem, size = 0x10000, scoped, tag = 'input window, operand 4']
    #allocation9 [shape = 'u8[8192]{0}', space=vmem, size = 0x2000, scoped, tag = 'output window, operand 0, single buffered']
    #allocation10 [shape = 'u8[2048]{0}', space=vmem, size = 0x800, scoped, tag = 'output window, operand 1']
    #allocation11 [shape = 's32[2]{0}', space=sflag, size = 0x8, scoped, tag = 'scoped memory for tpu_custom_call.1']
    %16 = vsyncpa [#allocation3], 0
    %17 = vsyncpa [#allocation6], 0
    %18 = vsyncpa [#allocation4], 0
    %19 = vsyncpa [#allocation11], 0
    %s20 = scalar_lea.sflag [#allocation11], 1
    %21 = vsyncpa %s20, 0
    loop: start=0, step=1, limit=4
    $region2: #{tpu_custom_call.1} parent=1 // loop_pre_header
      _
    $region3: #{tpu_custom_call.1} parent=1 // loop_header
      %s23 = sphi 0, %s27
      %p24 = scmp.ge.s32.totalorder %s23, 4
      %s31 = sphi 0, %s31
      %s33 = sphi 0, %s31
      %s34 = sphi 0, %s33
      %s48 = sphi 0, %s34
      %s52 = sphi 0, %s52
      %s54 = sphi 0, %s52
      %s55 = sphi 0, %s54
      %s69 = sphi 0, %s55
      %s73 = sphi 0, %s73
      %s75 = sphi 0, %s73
      %s76 = sphi 0, %s75
      %s90 = sphi 0, %s76
      %s96 = sphi 0, %s98
      %s99 = sphi 0, %s96
      %s100 = sphi 0, %s99
      %s116 = sphi 0, %s100
      %s122 = sphi 0, %s124
      %s125 = sphi 0, %s122
      %s126 = sphi 0, %s125
      %s142 = sphi 0, %s126
      %s148 = sphi 0, %s150
      %s151 = sphi 0, %s148
      %s152 = sphi 0, %s151
      %s168 = sphi 0, %s152
      %s174 = sphi 0, %s176
      %s177 = sphi 0, %s174
      %s178 = sphi 0, %s177
      %s194 = sphi 0, %s178
      %s200 = sphi 0, %s202
      %s203 = sphi 0, %s200
      %s204 = sphi 0, %s203
      %s220 = sphi 0, %s204
      %s226 = sphi 0, %s228
      %s229 = sphi 0, %s226
      %s230 = sphi 0, %s229
      %s246 = sphi 0, %s230
      %s250 = sphi 0, %s250
      %s252 = sphi 0, %s250
      %s253 = sphi 0, %s252
      %s267 = sphi 0, %s253
      %s273 = sphi 0, %s275
      %s276 = sphi 0, %s273
      %s277 = sphi 0, %s276
      %s293 = sphi 0, %s277
    $region4: #{tpu_custom_call.1} parent=1 // loop_header_branch
      %26 = sbr.rel (%p24) target = $region8
    $region5: #{tpu_custom_call.1} parent=1 // loop_body
      %s28 = ssub.s32 %s23, 1
      %s29 = ssub.s32 %s23, 2
      %s30 = sadd.s32 %s23, 1
      %s32 = sadd.s32 %s31, 1
      %p35 = scmp.eq.s32.totalorder %s23, 1
      %p36 = scmp.ne.s32.totalorder %s31, %s33
      %p37 = scmp.eq.s32.totalorder %s23, 0
      %p38 = por %p36, %p37
      %p39 = scmp.ne.s32.totalorder %s31, %s33
      %p40 = scmp.eq.s32.totalorder %s28, 1
      %p41 = por %p39, %p40
      %p42 = scmp.ne.s32.totalorder %s33, %s34
      %p43 = scmp.eq.s32.totalorder %s28, 0
      %p44 = por %p42, %p43
      %p45 = scmp.ne.s32.totalorder %s33, %s34
      %p46 = scmp.eq.s32.totalorder %s29, 1
      %p47 = por %p45, %p46
      %p49 = scmp.ne.s32.totalorder %s34, %s48
      %p50 = scmp.eq.s32.totalorder %s29, 0
      %p51 = por %p49, %p50
      %s53 = sadd.s32 %s52, 1
      %p56 = scmp.eq.s32.totalorder %s23, 1
      %p57 = scmp.ne.s32.totalorder %s52, %s54
      %p58 = scmp.eq.s32.totalorder %s23, 0
      %p59 = por %p57, %p58
      %p60 = scmp.ne.s32.totalorder %s52, %s54
      %p61 = scmp.eq.s32.totalorder %s28, 1
      %p62 = por %p60, %p61
      %p63 = scmp.ne.s32.totalorder %s54, %s55
      %p64 = scmp.eq.s32.totalorder %s28, 0
      %p65 = por %p63, %p64
      %p66 = scmp.ne.s32.totalorder %s54, %s55
      %p67 = scmp.eq.s32.totalorder %s29, 1
      %p68 = por %p66, %p67
      %p70 = scmp.ne.s32.totalorder %s55, %s69
      %p71 = scmp.eq.s32.totalorder %s29, 0
      %p72 = por %p70, %p71
      %s74 = sadd.s32 %s73, 1
      %p77 = scmp.eq.s32.totalorder %s23, 1
      %p78 = scmp.ne.s32.totalorder %s73, %s75
      %p79 = scmp.eq.s32.totalorder %s23, 0
      %p80 = por %p78, %p79
      %p81 = scmp.ne.s32.totalorder %s73, %s75
      %p82 = scmp.eq.s32.totalorder %s28, 1
      %p83 = por %p81, %p82
      %p84 = scmp.ne.s32.totalorder %s75, %s76
      %p85 = scmp.eq.s32.totalorder %s28, 0
      %p86 = por %p84, %p85
      %p87 = scmp.ne.s32.totalorder %s75, %s76
      %p88 = scmp.eq.s32.totalorder %s29, 1
      %p89 = por %p87, %p88
      %p91 = scmp.ne.s32.totalorder %s76, %s90
      %p92 = scmp.eq.s32.totalorder %s29, 0
      %p93 = por %p91, %p92
      %s94 = ssub.s32 %s23, %s30
      %p95 = scmp.eq.s32.totalorder %s94, 0
      %s97 = sadd.s32 %s96, 1
      %s98 = scalar_select %p95, %s96, %s97
      %p101 = pneg %p95
      %p102 = scmp.eq.s32.totalorder %s23, 1
      %p103 = por %p101, %p102
      %p104 = scmp.ne.s32.totalorder %s96, %s99
      %p105 = scmp.eq.s32.totalorder %s23, 0
      %p106 = por %p104, %p105
      %p107 = scmp.ne.s32.totalorder %s96, %s99
      %p108 = scmp.eq.s32.totalorder %s28, 1
      %p109 = por %p107, %p108
      %p110 = scmp.ne.s32.totalorder %s99, %s100
      %p111 = scmp.eq.s32.totalorder %s28, 0
      %p112 = por %p110, %p111
      %p113 = scmp.ne.s32.totalorder %s99, %s100
      %p114 = scmp.eq.s32.totalorder %s29, 1
      %p115 = por %p113, %p114
      %p117 = scmp.ne.s32.totalorder %s100, %s116
      %p118 = scmp.eq.s32.totalorder %s29, 0
      %p119 = por %p117, %p118
      %s120 = ssub.s32 %s23, %s30
      %p121 = scmp.eq.s32.totalorder %s120, 0
      %s123 = sadd.s32 %s122, 1
      %s124 = scalar_select %p121, %s122, %s123
      %p127 = pneg %p121
      %p128 = scmp.eq.s32.totalorder %s23, 1
      %p129 = por %p127, %p128
      %p130 = scmp.ne.s32.totalorder %s122, %s125
      %p131 = scmp.eq.s32.totalorder %s23, 0
      %p132 = por %p130, %p131
      %p133 = scmp.ne.s32.totalorder %s122, %s125
      %p134 = scmp.eq.s32.totalorder %s28, 1
      %p135 = por %p133, %p134
      %p136 = scmp.ne.s32.totalorder %s125, %s126
      %p137 = scmp.eq.s32.totalorder %s28, 0
      %p138 = por %p136, %p137
      %p139 = scmp.ne.s32.totalorder %s125, %s126
      %p140 = scmp.eq.s32.totalorder %s29, 1
      %p141 = por %p139, %p140
      %p143 = scmp.ne.s32.totalorder %s126, %s142
      %p144 = scmp.eq.s32.totalorder %s29, 0
      %p145 = por %p143, %p144
      %s146 = ssub.s32 %s23, %s30
      %p147 = scmp.eq.s32.totalorder %s146, 0
      %s149 = sadd.s32 %s148, 1
      %s150 = scalar_select %p147, %s148, %s149
      %p153 = pneg %p147
      %p154 = scmp.eq.s32.totalorder %s23, 1
      %p155 = por %p153, %p154
      %p156 = scmp.ne.s32.totalorder %s148, %s151
      %p157 = scmp.eq.s32.totalorder %s23, 0
      %p158 = por %p156, %p157
      %p159 = scmp.ne.s32.totalorder %s148, %s151
      %p160 = scmp.eq.s32.totalorder %s28, 1
      %p161 = por %p159, %p160
      %p162 = scmp.ne.s32.totalorder %s151, %s152
      %p163 = scmp.eq.s32.totalorder %s28, 0
      %p164 = por %p162, %p163
      %p165 = scmp.ne.s32.totalorder %s151, %s152
      %p166 = scmp.eq.s32.totalorder %s29, 1
      %p167 = por %p165, %p166
      %p169 = scmp.ne.s32.totalorder %s152, %s168
      %p170 = scmp.eq.s32.totalorder %s29, 0
      %p171 = por %p169, %p170
      %s172 = ssub.s32 %s23, %s30
      %p173 = scmp.eq.s32.totalorder %s172, 0
      %s175 = sadd.s32 %s174, 1
      %s176 = scalar_select %p173, %s174, %s175
      %p179 = pneg %p173
      %p180 = scmp.eq.s32.totalorder %s23, 1
      %p181 = por %p179, %p180
      %p182 = scmp.ne.s32.totalorder %s174, %s177
      %p183 = scmp.eq.s32.totalorder %s23, 0
      %p184 = por %p182, %p183
      %p185 = scmp.ne.s32.totalorder %s174, %s177
      %p186 = scmp.eq.s32.totalorder %s28, 1
      %p187 = por %p185, %p186
      %p188 = scmp.ne.s32.totalorder %s177, %s178
      %p189 = scmp.eq.s32.totalorder %s28, 0
      %p190 = por %p188, %p189
      %p191 = scmp.ne.s32.totalorder %s177, %s178
      %p192 = scmp.eq.s32.totalorder %s29, 1
      %p193 = por %p191, %p192
      %p195 = scmp.ne.s32.totalorder %s178, %s194
      %p196 = scmp.eq.s32.totalorder %s29, 0
      %p197 = por %p195, %p196
      %s198 = ssub.s32 %s23, %s30
      %p199 = scmp.eq.s32.totalorder %s198, 0
      %s201 = sadd.s32 %s200, 1
      %s202 = scalar_select %p199, %s200, %s201
      %p205 = pneg %p199
      %p206 = scmp.eq.s32.totalorder %s23, 1
      %p207 = por %p205, %p206
      %p208 = scmp.ne.s32.totalorder %s200, %s203
      %p209 = scmp.eq.s32.totalorder %s23, 0
      %p210 = por %p208, %p209
      %p211 = scmp.ne.s32.totalorder %s200, %s203
      %p212 = scmp.eq.s32.totalorder %s28, 1
      %p213 = por %p211, %p212
      %p214 = scmp.ne.s32.totalorder %s203, %s204
      %p215 = scmp.eq.s32.totalorder %s28, 0
      %p216 = por %p214, %p215
      %p217 = scmp.ne.s32.totalorder %s203, %s204
      %p218 = scmp.eq.s32.totalorder %s29, 1
      %p219 = por %p217, %p218
      %p221 = scmp.ne.s32.totalorder %s204, %s220
      %p222 = scmp.eq.s32.totalorder %s29, 0
      %p223 = por %p221, %p222
      %s224 = ssub.s32 %s23, %s30
      %p225 = scmp.eq.s32.totalorder %s224, 0
      %s227 = sadd.s32 %s226, 1
      %s228 = scalar_select %p225, %s226, %s227
      %p231 = pneg %p225
      %p232 = scmp.eq.s32.totalorder %s23, 1
      %p233 = por %p231, %p232
      %p234 = scmp.ne.s32.totalorder %s226, %s229
      %p235 = scmp.eq.s32.totalorder %s23, 0
      %p236 = por %p234, %p235
      %p237 = scmp.ne.s32.totalorder %s226, %s229
      %p238 = scmp.eq.s32.totalorder %s28, 1
      %p239 = por %p237, %p238
      %p240 = scmp.ne.s32.totalorder %s229, %s230
      %p241 = scmp.eq.s32.totalorder %s28, 0
      %p242 = por %p240, %p241
      %p243 = scmp.ne.s32.totalorder %s229, %s230
      %p244 = scmp.eq.s32.totalorder %s29, 1
      %p245 = por %p243, %p244
      %p247 = scmp.ne.s32.totalorder %s230, %s246
      %p248 = scmp.eq.s32.totalorder %s29, 0
      %p249 = por %p247, %p248
      %s251 = sadd.s32 %s250, 1
      %p254 = scmp.eq.s32.totalorder %s23, 1
      %p255 = scmp.ne.s32.totalorder %s250, %s252
      %p256 = scmp.eq.s32.totalorder %s23, 0
      %p257 = por %p255, %p256
      %p258 = scmp.ne.s32.totalorder %s250, %s252
      %p259 = scmp.eq.s32.totalorder %s28, 1
      %p260 = por %p258, %p259
      %p261 = scmp.ne.s32.totalorder %s252, %s253
      %p262 = scmp.eq.s32.totalorder %s28, 0
      %p263 = por %p261, %p262
      %p264 = scmp.ne.s32.totalorder %s252, %s253
      %p265 = scmp.eq.s32.totalorder %s29, 1
      %p266 = por %p264, %p265
      %p268 = scmp.ne.s32.totalorder %s253, %s267
      %p269 = scmp.eq.s32.totalorder %s29, 0
      %p270 = por %p268, %p269
      %s271 = ssub.s32 %s23, %s30
      %p272 = scmp.eq.s32.totalorder %s271, 0
      %s274 = sadd.s32 %s273, 1
      %s275 = scalar_select %p272, %s273, %s274
      %p278 = pneg %p272
      %p279 = scmp.eq.s32.totalorder %s23, 1
      %p280 = por %p278, %p279
      %p281 = scmp.ne.s32.totalorder %s273, %s276
      %p282 = scmp.eq.s32.totalorder %s23, 0
      %p283 = por %p281, %p282
      %p284 = scmp.ne.s32.totalorder %s273, %s276
      %p285 = scmp.eq.s32.totalorder %s28, 1
      %p286 = por %p284, %p285
      %p287 = scmp.ne.s32.totalorder %s276, %s277
      %p288 = scmp.eq.s32.totalorder %s28, 0
      %p289 = por %p287, %p288
      %p290 = scmp.ne.s32.totalorder %s276, %s277
      %p291 = scmp.eq.s32.totalorder %s29, 1
      %p292 = por %p290, %p291
      %p294 = scmp.ne.s32.totalorder %s277, %s293
      %p295 = scmp.eq.s32.totalorder %s29, 0
      %p296 = por %p294, %p295
      %p297 = scmp.le.s32.totalorder 1, %s23
      %p298 = scmp.lt.s32.totalorder %s23, 3
      %p299 = pnand %p297, %p298
      %p300 = pneg %p299
      // Predicated region
      $region9: #{tpu_custom_call.1} parent=5 // pred_check
        _
      $region10: #{tpu_custom_call.1} parent=5 // pred_check_branch
        %302 = sbr.rel (%p299) target = $region12
      $region11: #{tpu_custom_call.1} parent=5 // pred_region
        %s303 = ssub.s32 %s23, 1
        // Predicated region
        $region13: #{tpu_custom_call.1} parent=11 // pred_check
          %p304 = pneg %p44
        $region14: #{tpu_custom_call.1} parent=11 // pred_check_branch
          %306 = sbr.rel (%p304) target = $region16
        $region15: #{tpu_custom_call.1} parent=11 // pred_region
          %s308 = ssub.s32 128, 128
          %309 = vsyncadd [#allocation3], %s308
          %s310 = sshll.u32 [#allocation2], 4
          %s311 = int_to_ptr.vmem [resolvable:$true] %s310
          %316 = dma.hbm_to_vmem [thread:$0]  %s0, 128, %s311, [#allocation3], 64, 64, 4
        $region16: #{tpu_custom_call.1} parent=11 // pred_fallthru
          _
        // Predicated region
        $region17: #{tpu_custom_call.1} parent=11 // pred_check
          %p317 = pneg %p65
        $region18: #{tpu_custom_call.1} parent=11 // pred_check_branch
          %319 = sbr.rel (%p317) target = $region20
        $region19: #{tpu_custom_call.1} parent=11 // pred_region
          _
        $region20: #{tpu_custom_call.1} parent=11 // pred_fallthru
          _
        // Predicated region
        $region21: #{tpu_custom_call.1} parent=11 // pred_check
          %p320 = pneg %p86
        $region22: #{tpu_custom_call.1} parent=11 // pred_check_branch
          %322 = sbr.rel (%p320) target = $region24
        $region23: #{tpu_custom_call.1} parent=11 // pred_region
          %s324 = ssub.s32 256, 256
          %325 = vsyncadd [#allocation6], %s324
          %s326 = sshll.u32 [#allocation5], 4
          %s327 = int_to_ptr.vmem [resolvable:$true] %s326
          %332 = dma.hbm_to_vmem [thread:$0]  %s2, 256, %s327, [#allocation6], 128, 128, 8
        $region24: #{tpu_custom_call.1} parent=11 // pred_fallthru
          _
      $region12: #{tpu_custom_call.1} parent=5 // pred_fallthru
        _
      %p333 = scmp.lt.s32.totalorder %s23, 2
      // Predicated region
      $region25: #{tpu_custom_call.1} parent=5 // pred_check
        %p334 = pneg %p333
      $region26: #{tpu_custom_call.1} parent=5 // pred_check_branch
        %336 = sbr.rel (%p334) target = $region28
      $region27: #{tpu_custom_call.1} parent=5 // pred_region
        // Predicated region
        $region29: #{tpu_custom_call.1} parent=27 // pred_check
          %p337 = pneg %p106
        $region30: #{tpu_custom_call.1} parent=27 // pred_check_branch
          %339 = sbr.rel (%p337) target = $region32
        $region31: #{tpu_custom_call.1} parent=27 // pred_region
          %s340 = sand.u32 %s23, 1
          %s341 = scalar_lea.sflag [#allocation3], %s340
          %s342 = sand.u32 %s96, 1
          %s343 = smul.addr %s342, 64
          %s344 = scalar_lea.vmem [#allocation7], %s343
          %s346 = ssub.s32 1024, 1024
          %347 = vsyncadd %s341, %s346
          %s348 = smul.addr %s23, 16
          %s349 = smul.addr %s348, 64
          %s350 = scalar_lea.hbm %s3, %s349
          %s351 = sshll.u32 %s344, 4
          %s352 = int_to_ptr.vmem [resolvable:$true] %s351
          %357 = dma.hbm_to_vmem [thread:$0]  %s350, 1024, %s352, %s341, 64, 64, 4
        $region32: #{tpu_custom_call.1} parent=27 // pred_fallthru
          _
        // Predicated region
        $region33: #{tpu_custom_call.1} parent=27 // pred_check
          %p358 = pneg %p132
        $region34: #{tpu_custom_call.1} parent=27 // pred_check_branch
          %360 = sbr.rel (%p358) target = $region36
        $region35: #{tpu_custom_call.1} parent=27 // pred_region
          %s361 = sand.u32 %s23, 1
          %s362 = scalar_lea.sflag [#allocation3], %s361
          %s363 = sand.u32 %s122, 1
          %s364 = smul.addr %s363, 64
          %s365 = scalar_lea.vmem [#allocation8], %s364
          %s367 = ssub.s32 1024, 1024
          %368 = vsyncadd %s362, %s367
          %s369 = smul.addr %s23, 16
          %s370 = smul.addr %s369, 64
          %s371 = scalar_lea.hbm %s4, %s370
          %s372 = sshll.u32 %s365, 4
          %s373 = int_to_ptr.vmem [resolvable:$true] %s372
          %378 = dma.hbm_to_vmem [thread:$0]  %s371, 1024, %s373, %s362, 64, 64, 4
        $region36: #{tpu_custom_call.1} parent=27 // pred_fallthru
          _
        // Predicated region
        $region37: #{tpu_custom_call.1} parent=27 // pred_check
          %p379 = pneg %p158
        $region38: #{tpu_custom_call.1} parent=27 // pred_check_branch
          %381 = sbr.rel (%p379) target = $region40
        $region39: #{tpu_custom_call.1} parent=27 // pred_region
          %p382 = scmp.lt.s32.totalorder %s23, 1
          %s383 = scalar_select %p382, %s23, 1
          %s384 = scalar_lea.vmem %s5, %s383
        $region40: #{tpu_custom_call.1} parent=27 // pred_fallthru
          _
        // Predicated region
        $region41: #{tpu_custom_call.1} parent=27 // pred_check
          %p385 = pneg %p184
        $region42: #{tpu_custom_call.1} parent=27 // pred_check_branch
          %387 = sbr.rel (%p385) target = $region44
        $region43: #{tpu_custom_call.1} parent=27 // pred_region
          %p388 = scmp.lt.s32.totalorder %s23, 1
          %s389 = scalar_select %p388, %s23, 1
          %s390 = scalar_lea.vmem %s6, %s389
        $region44: #{tpu_custom_call.1} parent=27 // pred_fallthru
          _
        // Predicated region
        $region45: #{tpu_custom_call.1} parent=27 // pred_check
          %p391 = pneg %p210
        $region46: #{tpu_custom_call.1} parent=27 // pred_check_branch
          %393 = sbr.rel (%p391) target = $region48
        $region47: #{tpu_custom_call.1} parent=27 // pred_region
          %p394 = scmp.lt.s32.totalorder %s23, 1
          %s395 = scalar_select %p394, %s23, 1
          %s396 = scalar_lea.vmem %s7, %s395
        $region48: #{tpu_custom_call.1} parent=27 // pred_fallthru
          _
        // Predicated region
        $region49: #{tpu_custom_call.1} parent=27 // pred_check
          %p397 = pneg %p236
        $region50: #{tpu_custom_call.1} parent=27 // pred_check_branch
          %399 = sbr.rel (%p397) target = $region52
        $region51: #{tpu_custom_call.1} parent=27 // pred_region
          %p400 = scmp.lt.s32.totalorder %s23, 1
          %s401 = scalar_select %p400, %s23, 1
          %s402 = scalar_lea.vmem %s8, %s401
        $region52: #{tpu_custom_call.1} parent=27 // pred_fallthru
          _
      $region28: #{tpu_custom_call.1} parent=5 // pred_fallthru
        _
      %p403 = scmp.le.s32.totalorder 1, %s23
      %p404 = scmp.lt.s32.totalorder %s23, 3
      %p405 = pnand %p403, %p404
      %p406 = pneg %p405
      // Predicated region
      $region53: #{tpu_custom_call.1} parent=5 // pred_check
        _
      $region54: #{tpu_custom_call.1} parent=5 // pred_check_branch
        %408 = sbr.rel (%p405) target = $region56
      $region55: #{tpu_custom_call.1} parent=5 // pred_region
        %s409 = ssub.s32 %s23, 1
        // Predicated region
        $region57: #{tpu_custom_call.1} parent=55 // pred_check
          %p410 = pneg %p44
        $region58: #{tpu_custom_call.1} parent=55 // pred_check_branch
          %412 = sbr.rel (%p410) target = $region60
        $region59: #{tpu_custom_call.1} parent=55 // pred_region
          %413 = dma.done [#allocation3], 128
        $region60: #{tpu_custom_call.1} parent=55 // pred_fallthru
          _
        // Predicated region
        $region61: #{tpu_custom_call.1} parent=55 // pred_check
          %p414 = pneg %p86
        $region62: #{tpu_custom_call.1} parent=55 // pred_check_branch
          %416 = sbr.rel (%p414) target = $region64
        $region63: #{tpu_custom_call.1} parent=55 // pred_region
          %417 = dma.done [#allocation6], 256
        $region64: #{tpu_custom_call.1} parent=55 // pred_fallthru
          _
        %s418 = sand.u32 %s28, 1
        %s419 = scalar_lea.sflag [#allocation3], %s418
        %s420 = sand.u32 %s99, 1
        %s421 = smul.addr %s420, 64
        %s422 = scalar_lea.vmem [#allocation7], %s421
        // Predicated region
        $region65: #{tpu_custom_call.1} parent=55 // pred_check
          %p423 = pneg %p112
        $region66: #{tpu_custom_call.1} parent=55 // pred_check_branch
          %425 = sbr.rel (%p423) target = $region68
        $region67: #{tpu_custom_call.1} parent=55 // pred_region
          %426 = dma.done %s419, 1024
        $region68: #{tpu_custom_call.1} parent=55 // pred_fallthru
          _
        %s427 = sand.u32 %s28, 1
        %s428 = scalar_lea.sflag [#allocation3], %s427
        %s429 = sand.u32 %s125, 1
        %s430 = smul.addr %s429, 64
        %s431 = scalar_lea.vmem [#allocation8], %s430
        // Predicated region
        $region69: #{tpu_custom_call.1} parent=55 // pred_check
          %p432 = pneg %p138
        $region70: #{tpu_custom_call.1} parent=55 // pred_check_branch
          %434 = sbr.rel (%p432) target = $region72
        $region71: #{tpu_custom_call.1} parent=55 // pred_region
          %435 = dma.done %s428, 1024
        $region72: #{tpu_custom_call.1} parent=55 // pred_fallthru
          _
        %p436 = pneg %p44
        %p437 = pneg %p41
        %p438 = pneg %p65
        %p439 = pneg %p62
        %p440 = pneg %p86
        %p441 = pneg %p83
        %s442 = sand.u32 %s28, 1
        %s443 = scalar_lea.sflag [#allocation3], %s442
        %s444 = sand.u32 %s99, 1
        %s445 = smul.addr %s444, 64
        %s446 = scalar_lea.vmem [#allocation7], %s445
        %p447 = pneg %p112
        %p448 = pneg %p109
        %s449 = sand.u32 %s28, 1
        %s450 = scalar_lea.sflag [#allocation3], %s449
        %s451 = sand.u32 %s125, 1
        %s452 = smul.addr %s451, 64
        %s453 = scalar_lea.vmem [#allocation8], %s452
        %p454 = pneg %p138
        %p455 = pneg %p135
        %p456 = scmp.lt.s32.totalorder %s28, 1
        %s457 = scalar_select %p456, %s28, 1
        %s458 = scalar_lea.vmem %s5, %s457
        %p459 = pneg %p164
        %p460 = pneg %p161
        %p461 = scmp.lt.s32.totalorder %s28, 1
        %s462 = scalar_select %p461, %s28, 1
        %s463 = scalar_lea.vmem %s6, %s462
        %p464 = pneg %p190
        %p465 = pneg %p187
        %p466 = scmp.lt.s32.totalorder %s28, 1
        %s467 = scalar_select %p466, %s28, 1
        %s468 = scalar_lea.vmem %s7, %s467
        %p469 = pneg %p216
        %p470 = pneg %p213
        %p471 = scmp.lt.s32.totalorder %s28, 1
        %s472 = scalar_select %p471, %s28, 1
        %s473 = scalar_lea.vmem %s8, %s472
        %p474 = pneg %p242
        %p475 = pneg %p239
        %p476 = pneg %p263
        %p477 = pneg %p260
        %p478 = pneg %p289
        %p479 = pneg %p286
        %s480 = sand.u32 %s276, 1
        %s481 = scalar_lea.sflag [#allocation11], %s480
        %s482 = sand.u32 %s276, 1
        %s483 = smul.addr %s482, 2
        %s484 = scalar_lea.vmem [#allocation10], %s483
        %p485 = scmp.lt.s32.totalorder %s28, 1
        %s486 = scalar_select %p485, %s28, 1
        %s487 = scalar_lea.vmem %s5, %s486
        %p488 = scmp.lt.s32.totalorder %s28, 1
        %s489 = scalar_select %p488, %s28, 1
        %s490 = scalar_lea.vmem %s6, %s489
        %p491 = scmp.lt.s32.totalorder %s28, 1
        %s492 = scalar_select %p491, %s28, 1
        %s493 = scalar_lea.vmem %s7, %s492
        %p494 = scmp.lt.s32.totalorder %s28, 1
        %s495 = scalar_select %p494, %s28, 1
        %s496 = scalar_lea.vmem %s8, %s495
        %p498 = scmp.eq.s32.totalorder %s28, 0
        // Predicated region
        $region73: #{tpu_custom_call.1} parent=55 // pred_check
          %p499 = pneg %p498
        $region74: #{tpu_custom_call.1} parent=55 // pred_check_branch
          %501 = sbr.rel (%p499) target = $region76
        $region75: #{tpu_custom_call.1} parent=55 // pred_region
          %v502 = vld [vmem:[#allocation5] sm:$0xff]
          %v503 = vld [vmem:[#allocation5 + $0x8] sm:$0xff]
          %504 = vst [vmem:[#allocation9] sm:$0xff] %v502
          %505 = vst [vmem:[#allocation9 + $0x8] sm:$0xff] %v503
        $region76: #{tpu_custom_call.1} parent=55 // pred_fallthru
          _
        %v506 = vld [vmem:[#allocation9] sm:$0xff]
        %v507 = vld [vmem:[#allocation9 + $0x8] sm:$0xff]
        %v508 = vld [vmem:[#allocation2] sm:$0xf]
        %v509 = vld [vmem:[#allocation2 + $0x4] sm:$0xf]
        %v510 = vpack.c.bf16 %v507, %v506
        %v513 = vunpack.c.l.b16 %v508
        %v514 = vunpack.c.l.b16 %v509
        %v515 = vpack.c.b16 %v514, %v513
        %vm516 = vcmask 130048
        %v518 = vsel %vm516, %v515, 0
        %520 = vmatprep.subr.bf16.mxu0 0
        %521 = vmatpush1.bf16.msra.mxu0 0
        %522 = vmatprep.subr.bf16.mxu0 0
        %523 = vmatpush1.bf16.msra.mxu0 0
        %524 = vmatprep.subr.bf16.mxu0 0
        %525 = vmatpush1.bf16.msra.mxu0 0
        %526 = vmatprep.subr.bf16.mxu0 0
        %527 = vmatpush1.bf16.msra.mxu0 0
        %528 = vmatprep.subr.bf16.mxu0 0
        %529 = vmatpush1.bf16.msra.mxu0 0
        %530 = vmatprep.subr.bf16.mxu0 0
        %531 = vmatpush1.bf16.msra.mxu0 0
        %532 = vmatprep.subr.bf16.mxu0 0
        %533 = vmatpush1.bf16.msra.mxu0 0
        %534 = vmatprep.subr.bf16.mxu0 0
        %535 = vmatpush1.bf16.msra.mxu0 %v510
        %536 = vmatprep.subr.bf16.mxu0 0
        %537 = vmatpush2.bf16.msra.mxu0 0
        %538 = vmatprep.subr.bf16.mxu0 0
        %539 = vmatpush2.bf16.msra.mxu0 0
        %540 = vmatprep.subr.bf16.mxu0 0
        %541 = vmatpush2.bf16.msra.mxu0 0
        %542 = vmatprep.subr.bf16.mxu0 0
        %543 = vmatpush2.bf16.msra.mxu0 0
        %544 = vmatprep.subr.bf16.mxu0 0
        %545 = vmatpush2.bf16.msra.mxu0 0
        %546 = vmatprep.subr.bf16.mxu0 0
        %547 = vmatpush2.bf16.msra.mxu0 0
        %548 = vmatprep.subr.bf16.mxu0 0
        %549 = vmatpush2.bf16.msra.mxu0 0
        %550 = vmatprep.subr.bf16.mxu0 0
        %551 = vmatpush2.bf16.msra.mxu0 0
        %552 = vmatprep.mubr.bf16.mxu0 0
        %553 = vmatmul.mubr.bf16.gmra.mxu0 %v518
        %v554 = vpop.f32.mrf.mxu0
        %v555 = vadd.f32 0.0, %v554
        %v556 = vpop.f32.mrf.mxu0
        %v557 = vpop.f32.mrf.mxu0
        %v558 = vadd.f32 0.0, %v557
        %v559 = vpop.f32.mrf.mxu0
        %560 = vdwg.mxu0
        %v561 = vadd.f32 %v506, %v555
        %v562 = vadd.f32 %v507, %v558
        %v563 = vpack.c.bf16 %v562, %v561
        %v564 = vld [vmem:[%s422] sm:$0xf]
        %v565 = vld [vmem:[%s422 + $0x4] sm:$0xf]
        %v566 = vld [vmem:[%s422 + $0x8] sm:$0xf]
        %v567 = vld [vmem:[%s422 + $0xc] sm:$0xf]
        %v568 = vld [vmem:[%s422 + $0x10] sm:$0xf]
        %v569 = vld [vmem:[%s422 + $0x14] sm:$0xf]
        %v570 = vld [vmem:[%s422 + $0x18] sm:$0xf]
        %v571 = vld [vmem:[%s422 + $0x1c] sm:$0xf]
        %v572 = vld [vmem:[%s422 + $0x20] sm:$0xf]
        %v573 = vld [vmem:[%s422 + $0x24] sm:$0xf]
        %v574 = vld [vmem:[%s422 + $0x28] sm:$0xf]
        %v575 = vld [vmem:[%s422 + $0x2c] sm:$0xf]
        %v576 = vld [vmem:[%s422 + $0x30] sm:$0xf]
        %v577 = vld [vmem:[%s422 + $0x34] sm:$0xf]
        %v578 = vld [vmem:[%s422 + $0x38] sm:$0xf]
        %v579 = vld [vmem:[%s422 + $0x3c] sm:$0xf]
        %v596 = vunpack.c.l.b16 %v564
        %v597 = vunpack.c.l.b16 %v565
        %v598 = vunpack.c.l.b16 %v566
        %v599 = vunpack.c.l.b16 %v567
        %v600 = vunpack.c.l.b16 %v568
        %v601 = vunpack.c.l.b16 %v569
        %v602 = vunpack.c.l.b16 %v570
        %v603 = vunpack.c.l.b16 %v571
        %v604 = vunpack.c.l.b16 %v572
        %v605 = vunpack.c.l.b16 %v573
        %v606 = vunpack.c.l.b16 %v574
        %v607 = vunpack.c.l.b16 %v575
        %v608 = vunpack.c.l.b16 %v576
        %v609 = vunpack.c.l.b16 %v577
        %v610 = vunpack.c.l.b16 %v578
        %v611 = vunpack.c.l.b16 %v579
        %v612 = vpack.c.b16 %v597, %v596
        %v613 = vpack.c.b16 %v599, %v598
        %v614 = vpack.c.b16 %v601, %v600
        %v615 = vpack.c.b16 %v603, %v602
        %v616 = vpack.c.b16 %v605, %v604
        %v617 = vpack.c.b16 %v607, %v606
        %v618 = vpack.c.b16 %v609, %v608
        %v619 = vpack.c.b16 %v611, %v610
        %628 = vmatprep.subr.bf16.mxu0 0
        %629 = vmatpush1.bf16.msra.mxu0 %v619
        %630 = vmatprep.subr.bf16.mxu0 0
        %631 = vmatpush1.bf16.msra.mxu0 %v618
        %632 = vmatprep.subr.bf16.mxu0 0
        %633 = vmatpush1.bf16.msra.mxu0 %v617
        %634 = vmatprep.subr.bf16.mxu0 0
        %635 = vmatpush1.bf16.msra.mxu0 %v616
        %636 = vmatprep.subr.bf16.mxu0 0
        %637 = vmatpush1.bf16.msra.mxu0 %v615
        %638 = vmatprep.subr.bf16.mxu0 0
        %639 = vmatpush1.bf16.msra.mxu0 %v614
        %640 = vmatprep.subr.bf16.mxu0 0
        %641 = vmatpush1.bf16.msra.mxu0 %v613
        %642 = vmatprep.subr.bf16.mxu0 0
        %643 = vmatpush1.bf16.msra.mxu0 %v612
        %644 = vmatprep.subr.bf16.mxu0 0
        %645 = vmatpush2.bf16.msra.mxu0 0
        %646 = vmatprep.subr.bf16.mxu0 0
        %647 = vmatpush2.bf16.msra.mxu0 0
        %648 = vmatprep.subr.bf16.mxu0 0
        %649 = vmatpush2.bf16.msra.mxu0 0
        %650 = vmatprep.subr.bf16.mxu0 0
        %651 = vmatpush2.bf16.msra.mxu0 0
        %652 = vmatprep.subr.bf16.mxu0 0
        %653 = vmatpush2.bf16.msra.mxu0 0
        %654 = vmatprep.subr.bf16.mxu0 0
        %655 = vmatpush2.bf16.msra.mxu0 0
        %656 = vmatprep.subr.bf16.mxu0 0
        %657 = vmatpush2.bf16.msra.mxu0 0
        %658 = vmatprep.subr.bf16.mxu0 0
        %659 = vmatpush2.bf16.msra.mxu0 0
        %660 = vmatprep.mubr.bf16.mxu0 0
        %661 = vmatmul.mubr.bf16.gmra.mxu0 %v563
        %v662 = vpop.f32.mrf.mxu0
        %v663 = vadd.f32 0.0, %v662
        %v664 = vpop.f32.mrf.mxu0
        %v665 = vpop.f32.mrf.mxu0
        %v666 = vadd.f32 0.0, %v665
        %v667 = vpop.f32.mrf.mxu0
        %668 = vdwg.mxu0
        %v669 = vadd.f32 %v663, %v666
        %v670 = vrot.slane %v669, 4
        %v671 = vadd.f32 %v669, %v670
        %v672 = vrot.slane %v671, 2
        %v673 = vadd.f32 %v671, %v672
        %v674 = vrot.slane %v673, 1
        %v675 = vadd.f32 %v673, %v674
        %v676 = vmul.f32 %v675, 0.0625
        %v677 = vsub.f32 %v663, %v676
        %v678 = vsub.f32 %v666, %v676
        %v679 = vmul.f32 %v677, %v677
        %v680 = vmul.f32 %v678, %v678
        %v681 = vadd.f32 %v679, %v680
        %v682 = vrot.slane %v681, 4
        %v683 = vadd.f32 %v681, %v682
        %v684 = vrot.slane %v683, 2
        %v685 = vadd.f32 %v683, %v684
        %v686 = vrot.slane %v685, 1
        %v687 = vadd.f32 %v685, %v686
        %v688 = vmul.f32 %v687, 0.0625
        %v689 = vadd.f32 %v688, 1e-05
        %v690 = vrsqrt.pop %v689
        %v691 = vmul.f32 %v677, %v690
        %v692 = vmul.f32 %v678, %v690
        %v693 = vld [vmem:[%s487] sm:$0x1]
        %v695 = vlaneseq
        %v696 = vshrl.u32 %v695, 7
        %v697 = vsub.s32 0, %v696
        %v698 = vrot.slane %v693, %v697
        %v700 = vmul.f32 %v691, %v698
        %v701 = vmul.f32 %v692, %v698
        %v702 = vld [vmem:[%s490] sm:$0x1]
        %v704 = vlaneseq
        %v705 = vshrl.u32 %v704, 7
        %v706 = vsub.s32 0, %v705
        %v707 = vrot.slane %v702, %v706
        %v709 = vadd.f32 %v700, %v707
        %v710 = vadd.f32 %v701, %v707
        %v711 = vmax.f32 %v709, 0.0
        %v712 = vmax.f32 %v710, 0.0
        %v713 = vpack.c.bf16 %v712, %v711
        %v714 = vld [vmem:[%s431] sm:$0xf]
        %v715 = vld [vmem:[%s431 + $0x4] sm:$0xf]
        %v716 = vld [vmem:[%s431 + $0x8] sm:$0xf]
        %v717 = vld [vmem:[%s431 + $0xc] sm:$0xf]
        %v718 = vld [vmem:[%s431 + $0x10] sm:$0xf]
        %v719 = vld [vmem:[%s431 + $0x14] sm:$0xf]
        %v720 = vld [vmem:[%s431 + $0x18] sm:$0xf]
        %v721 = vld [vmem:[%s431 + $0x1c] sm:$0xf]
        %v722 = vld [vmem:[%s431 + $0x20] sm:$0xf]
        %v723 = vld [vmem:[%s431 + $0x24] sm:$0xf]
        %v724 = vld [vmem:[%s431 + $0x28] sm:$0xf]
        %v725 = vld [vmem:[%s431 + $0x2c] sm:$0xf]
        %v726 = vld [vmem:[%s431 + $0x30] sm:$0xf]
        %v727 = vld [vmem:[%s431 + $0x34] sm:$0xf]
        %v728 = vld [vmem:[%s431 + $0x38] sm:$0xf]
        %v729 = vld [vmem:[%s431 + $0x3c] sm:$0xf]
        %v746 = vunpack.c.l.b16 %v714
        %v747 = vunpack.c.l.b16 %v715
        %v748 = vunpack.c.l.b16 %v716
        %v749 = vunpack.c.l.b16 %v717
        %v750 = vunpack.c.l.b16 %v718
        %v751 = vunpack.c.l.b16 %v719
        %v752 = vunpack.c.l.b16 %v720
        %v753 = vunpack.c.l.b16 %v721
        %v754 = vunpack.c.l.b16 %v722
        %v755 = vunpack.c.l.b16 %v723
        %v756 = vunpack.c.l.b16 %v724
        %v757 = vunpack.c.l.b16 %v725
        %v758 = vunpack.c.l.b16 %v726
        %v759 = vunpack.c.l.b16 %v727
        %v760 = vunpack.c.l.b16 %v728
        %v761 = vunpack.c.l.b16 %v729
        %v762 = vpack.c.b16 %v747, %v746
        %v763 = vpack.c.b16 %v749, %v748
        %v764 = vpack.c.b16 %v751, %v750
        %v765 = vpack.c.b16 %v753, %v752
        %v766 = vpack.c.b16 %v755, %v754
        %v767 = vpack.c.b16 %v757, %v756
        %v768 = vpack.c.b16 %v759, %v758
        %v769 = vpack.c.b16 %v761, %v760
        %778 = vmatprep.subr.bf16.mxu0 0
        %779 = vmatpush1.bf16.msra.mxu0 %v769
        %780 = vmatprep.subr.bf16.mxu0 0
        %781 = vmatpush1.bf16.msra.mxu0 %v768
        %782 = vmatprep.subr.bf16.mxu0 0
        %783 = vmatpush1.bf16.msra.mxu0 %v767
        %784 = vmatprep.subr.bf16.mxu0 0
        %785 = vmatpush1.bf16.msra.mxu0 %v766
        %786 = vmatprep.subr.bf16.mxu0 0
        %787 = vmatpush1.bf16.msra.mxu0 %v765
        %788 = vmatprep.subr.bf16.mxu0 0
        %789 = vmatpush1.bf16.msra.mxu0 %v764
        %790 = vmatprep.subr.bf16.mxu0 0
        %791 = vmatpush1.bf16.msra.mxu0 %v763
        %792 = vmatprep.subr.bf16.mxu0 0
        %793 = vmatpush1.bf16.msra.mxu0 %v762
        %794 = vmatprep.subr.bf16.mxu0 0
        %795 = vmatpush2.bf16.msra.mxu0 0
        %796 = vmatprep.subr.bf16.mxu0 0
        %797 = vmatpush2.bf16.msra.mxu0 0
        %798 = vmatprep.subr.bf16.mxu0 0
        %799 = vmatpush2.bf16.msra.mxu0 0
        %800 = vmatprep.subr.bf16.mxu0 0
        %801 = vmatpush2.bf16.msra.mxu0 0
        %802 = vmatprep.subr.bf16.mxu0 0
        %803 = vmatpush2.bf16.msra.mxu0 0
        %804 = vmatprep.subr.bf16.mxu0 0
        %805 = vmatpush2.bf16.msra.mxu0 0
        %806 = vmatprep.subr.bf16.mxu0 0
        %807 = vmatpush2.bf16.msra.mxu0 0
        %808 = vmatprep.subr.bf16.mxu0 0
        %809 = vmatpush2.bf16.msra.mxu0 0
        %810 = vmatprep.mubr.bf16.mxu0 0
        %811 = vmatmul.mubr.bf16.gmra.mxu0 %v713
        %v812 = vpop.f32.mrf.mxu0
        %v813 = vadd.f32 0.0, %v812
        %v814 = vpop.f32.mrf.mxu0
        %v815 = vpop.f32.mrf.mxu0
        %v816 = vadd.f32 0.0, %v815
        %v817 = vpop.f32.mrf.mxu0
        %818 = vdwg.mxu0
        %v819 = vadd.f32 %v813, %v816
        %v820 = vrot.slane %v819, 4
        %v821 = vadd.f32 %v819, %v820
        %v822 = vrot.slane %v821, 2
        %v823 = vadd.f32 %v821, %v822
        %v824 = vrot.slane %v823, 1
        %v825 = vadd.f32 %v823, %v824
        %v826 = vmul.f32 %v825, 0.0625
        %v827 = vsub.f32 %v813, %v826
        %v828 = vsub.f32 %v816, %v826
        %v829 = vmul.f32 %v827, %v827
        %v830 = vmul.f32 %v828, %v828
        %v831 = vadd.f32 %v829, %v830
        %v832 = vrot.slane %v831, 4
        %v833 = vadd.f32 %v831, %v832
        %v834 = vrot.slane %v833, 2
        %v835 = vadd.f32 %v833, %v834
        %v836 = vrot.slane %v835, 1
        %v837 = vadd.f32 %v835, %v836
        %v838 = vmul.f32 %v837, 0.0625
        %v839 = vadd.f32 %v838, 1e-05
        %v840 = vrsqrt.pop %v839
        %v841 = vmul.f32 %v827, %v840
        %v842 = vmul.f32 %v828, %v840
        %v843 = vld [vmem:[%s493] sm:$0x1]
        %v845 = vlaneseq
        %v846 = vshrl.u32 %v845, 7
        %v847 = vsub.s32 0, %v846
        %v848 = vrot.slane %v843, %v847
        %v850 = vmul.f32 %v841, %v848
        %v851 = vmul.f32 %v842, %v848
        %v852 = vld [vmem:[%s496] sm:$0x1]
        %v854 = vlaneseq
        %v855 = vshrl.u32 %v854, 7
        %v856 = vsub.s32 0, %v855
        %v857 = vrot.slane %v852, %v856
        %v859 = vadd.f32 %v850, %v857
        %v860 = vadd.f32 %v851, %v857
        %v861 = vmax.f32 %v859, 0.0
        %v862 = vmax.f32 %v860, 0.0
        %863 = vst [vmem:[#allocation9] sm:$0xff] %v861
        %864 = vst [vmem:[#allocation9 + $0x8] sm:$0xff] %v862
        %v865 = vld [vmem:[%s1] sm:$0x1]
        %v866 = vpack.c.bf16 %v862, %v861
        %v868 = vsel %vm516, %v865, 0
        %870 = vmatprep.subr.bf16.mxu0 0
        %871 = vmatpush1.bf16.msra.mxu0 0
        %872 = vmatprep.subr.bf16.mxu0 0
        %873 = vmatpush1.bf16.msra.mxu0 0
        %874 = vmatprep.subr.bf16.mxu0 0
        %875 = vmatpush1.bf16.msra.mxu0 0
        %876 = vmatprep.subr.bf16.mxu0 0
        %877 = vmatpush1.bf16.msra.mxu0 0
        %878 = vmatprep.subr.bf16.mxu0 0
        %879 = vmatpush1.bf16.msra.mxu0 0
        %880 = vmatprep.subr.bf16.mxu0 0
        %881 = vmatpush1.bf16.msra.mxu0 0
        %882 = vmatprep.subr.bf16.mxu0 0
        %883 = vmatpush1.bf16.msra.mxu0 0
        %884 = vmatprep.subr.bf16.mxu0 0
        %885 = vmatpush1.bf16.msra.mxu0 %v866
        %886 = vmatprep.subr.bf16.mxu0 0
        %887 = vmatpush2.bf16.msra.mxu0 0
        %888 = vmatprep.subr.bf16.mxu0 0
        %889 = vmatpush2.bf16.msra.mxu0 0
        %890 = vmatprep.subr.bf16.mxu0 0
        %891 = vmatpush2.bf16.msra.mxu0 0
        %892 = vmatprep.subr.bf16.mxu0 0
        %893 = vmatpush2.bf16.msra.mxu0 0
        %894 = vmatprep.subr.bf16.mxu0 0
        %895 = vmatpush2.bf16.msra.mxu0 0
        %896 = vmatprep.subr.bf16.mxu0 0
        %897 = vmatpush2.bf16.msra.mxu0 0
        %898 = vmatprep.subr.bf16.mxu0 0
        %899 = vmatpush2.bf16.msra.mxu0 0
        %900 = vmatprep.subr.bf16.mxu0 0
        %901 = vmatpush2.bf16.msra.mxu0 0
        %902 = vmatprep.mubr.bf16.mxu0 0
        %903 = vmatmul.mubr.bf16.gmra.mxu0 %v868
        %v904 = vpop.f32.mrf.mxu0
        %v905 = vadd.f32 0.0, %v904
        %v906 = vpop.f32.mrf.mxu0
        %v907 = vpop.f32.mrf.mxu0
        %v908 = vpop.f32.mrf.mxu0
        %909 = vdwg.mxu0
        %910 = vst [vmem:[%s484] sm:$0x3] %v905
        %s911 = sand.u32 %s276, 1
        %s912 = scalar_lea.sflag [#allocation11], %s911
        %s913 = sand.u32 %s276, 1
        %s914 = smul.addr %s913, 2
        %s915 = scalar_lea.vmem [#allocation10], %s914
        // Predicated region
        $region77: #{tpu_custom_call.1} parent=55 // pred_check
          %p916 = pneg %p260
        $region78: #{tpu_custom_call.1} parent=55 // pred_check_branch
          %918 = sbr.rel (%p916) target = $region80
        $region79: #{tpu_custom_call.1} parent=55 // pred_region
          %s920 = ssub.s32 256, 256
          %921 = vsyncadd [#allocation4], %s920
          %s922 = sshll.u32 [#allocation9], 4
          %s923 = int_to_ptr.vmem [resolvable:$true] %s922
          %928 = dma.vmem_to_hbm [thread:$0]  %s923, 256, %s9, [#allocation4], 128, 128, 8
        $region80: #{tpu_custom_call.1} parent=55 // pred_fallthru
          _
        // Predicated region
        $region81: #{tpu_custom_call.1} parent=55 // pred_check
          %p929 = pneg %p286
        $region82: #{tpu_custom_call.1} parent=55 // pred_check_branch
          %931 = sbr.rel (%p929) target = $region84
        $region83: #{tpu_custom_call.1} parent=55 // pred_region
          %s933 = ssub.s32 32, 32
          %934 = vsyncadd %s912, %s933
          %s935 = smul.addr %s28, 32
          %s936 = scalar_lea.hbm %s10, %s935
          %s938 = sshll.u32 %s915, 4
          %s939 = int_to_ptr.vmem [resolvable:$true] %s938
          %941 = dma.vmem_to_hbm [thread:$0]  %s939, 32, %s936, %s912
        $region84: #{tpu_custom_call.1} parent=55 // pred_fallthru
          _
        // Predicated region
        $region85: #{tpu_custom_call.1} parent=55 // pred_check
          %p942 = pneg %p260
        $region86: #{tpu_custom_call.1} parent=55 // pred_check_branch
          %944 = sbr.rel (%p942) target = $region88
        $region87: #{tpu_custom_call.1} parent=55 // pred_region
          %945 = dma.done [#allocation4], 256
        $region88: #{tpu_custom_call.1} parent=55 // pred_fallthru
          _
      $region56: #{tpu_custom_call.1} parent=5 // pred_fallthru
        _
      %p946 = scmp.le.s32.totalorder 2, %s23
      // Predicated region
      $region89: #{tpu_custom_call.1} parent=5 // pred_check
        %p947 = pneg %p946
      $region90: #{tpu_custom_call.1} parent=5 // pred_check_branch
        %949 = sbr.rel (%p947) target = $region92
      $region91: #{tpu_custom_call.1} parent=5 // pred_region
        %s950 = ssub.s32 %s23, 2
        // Predicated region
        $region93: #{tpu_custom_call.1} parent=91 // pred_check
          %p951 = pneg %p292
        $region94: #{tpu_custom_call.1} parent=91 // pred_check_branch
          %953 = sbr.rel (%p951) target = $region96
        $region95: #{tpu_custom_call.1} parent=91 // pred_region
          %s954 = sand.u32 %s277, 1
          %s955 = scalar_lea.sflag [#allocation11], %s954
          %s956 = sand.u32 %s277, 1
          %s957 = smul.addr %s956, 2
          %s958 = scalar_lea.vmem [#allocation10], %s957
          %959 = dma.done %s955, 32
        $region96: #{tpu_custom_call.1} parent=91 // pred_fallthru
          _
      $region92: #{tpu_custom_call.1} parent=5 // pred_fallthru
        _
    $region6: #{tpu_custom_call.1} parent=1 // loop_footer
      %s27 = sadd.s32 1, %s23
    $region7: #{tpu_custom_call.1} parent=1 // loop_footer_branch
      %22 = sbr.rel target = $region3
    $region8: #{tpu_custom_call.1} parent=1 // loop_exit
      _
    %960 = vsyncpa [#allocation3], 1
    %s961 = scalar_lea.sflag [#allocation3], 1
    %962 = vsyncpa %s961, 1
    %963 = vsyncpa [#allocation6], 1
    %964 = vsyncpa [#allocation4], 1
    %s965 = scalar_lea.sflag [#allocation4], 1
    %966 = vsyncpa %s965, 1
    %967 = vsyncpa [#allocation11], 1
    %s968 = scalar_lea.sflag [#allocation11], 1
    %969 = vsyncpa %s968, 1

</llo_original>
